<compile_context>
chip_gen: v6e
topology: v6e:2x2x1
jax: 0.10.0
libtpu: 0.0.40
codegen_flags: <defaults>
</compile_context>

<pallas_src>
import numpy as np
import jax
import jax.numpy as jnp
from jax.experimental import pallas as pl
from jax.experimental.pallas import tpu as pltpu

# ---------------- model dimensions ----------------
B, T = 2, 8
D = 32                 # hidden_size
H = 4                  # num_attention_heads
DH = 16                # head_dim
ROPE = 8               # rope_dims
DQ = 16                # q_latent_dim
DKV = 16               # kv_latent_dim
DO = 16                # o_latent_dim
I = 64                 # intermediate_size
RF = 16                # ffn_rank
ROPE_THETA = 10000.0
RMS_EPS = 1e-6         # qkv_a_layernorm (RMSNorm) eps
LN_EPS = 1e-12         # layer_norm_eps

M = B * T              # total rows
HD = H * DH            # 64   (q lanes / k lanes / v lanes)
QK = 2 * HD            # 128  (q|k lanes, one lane tile)
IP = 128               # intermediate_size padded to a full lane tile


def _layernorm(x, w, b, eps):
    mu = jnp.mean(x, axis=-1, keepdims=True)
    xc = x - mu
    var = jnp.mean(xc * xc, axis=-1, keepdims=True)
    return xc * jax.lax.rsqrt(var + eps) * w + b


def _layer_kernel(x_ref, wa_ref, wqkv_ref, cs_ref, wo_ref, wig_ref, wout_ref,
                  vec_ref, o_ref):
    x = x_ref[...]                                                  # (T, D) f32

    # ---- qkv_a_proj + RMSNorm (RMS weight pre-folded into wqkv rows) ----
    lat = jnp.dot(x.astype(jnp.bfloat16), wa_ref[...],
                  preferred_element_type=jnp.float32)               # (T, DQ+DKV)
    lat = lat * jax.lax.rsqrt(jnp.mean(lat * lat, axis=-1, keepdims=True) + RMS_EPS)

    # ---- merged q_b|kv_b projection; columns = [q|k | rot(q|k) | v] ----
    qkv = jnp.dot(lat.astype(jnp.bfloat16), wqkv_ref[...],
                  preferred_element_type=jnp.float32)               # (T, 2*QK+HD)

    # RoPE: x*cos + rotate_half(x)*sin; all slabs are 128-lane-tile aligned.
    # The DH**-0.5 attention scale is already folded into the q columns.
    cos = cs_ref[:, :QK]
    sin = cs_ref[:, QK:]
    qk = qkv[:, :QK] * cos + qkv[:, QK:2 * QK] * sin                # (T, 128) f32
    v = qkv[:, 2 * QK:]                                             # (T, 64)  f32

    # ---- attention (no mask, eval-mode dropout): heads as batch dim ----
    q_h = qk[:, :HD].reshape(T, H, DH).transpose(1, 0, 2).astype(jnp.bfloat16)
    k_h = qk[:, HD:].reshape(T, H, DH).transpose(1, 0, 2).astype(jnp.bfloat16)
    v_h = v.reshape(T, H, DH).transpose(1, 0, 2).astype(jnp.bfloat16)   # (H,T,DH)

    s = jnp.einsum('hqd,hkd->hqk', q_h, k_h,
                   preferred_element_type=jnp.float32)              # (H, T, T)
    s = s - jnp.max(s, axis=-1, keepdims=True)
    p = jnp.exp(s)
    p = p * pl.reciprocal(jnp.sum(p, axis=-1, keepdims=True), approx=True)
    ctx = jnp.einsum('hqk,hkd->hqd', p.astype(jnp.bfloat16), v_h,
                     preferred_element_type=jnp.float32)            # (H, T, DH)
    attn = ctx.transpose(1, 0, 2).reshape(T, HD)                    # (T, H*DH)

    # ---- fused output-subspace projection: o_b_proj(o_a_proj(attn)) ----
    attn_out = jnp.dot(attn.astype(jnp.bfloat16), wo_ref[...],
                       preferred_element_type=jnp.float32)          # (T, D)

    # ---- residual + post-attention LayerNorm ----
    h1 = _layernorm(attn_out + x, vec_ref[0:1, :D], vec_ref[1:2, :D], LN_EPS)

    # ---- decomposed SwiGLU FFN (low-rank chains pre-fused, in|gate in
    #      separate 128-lane tiles, zero-padded lanes stay exactly zero) ----
    ig = jnp.dot(h1.astype(jnp.bfloat16), wig_ref[...],
                 preferred_element_type=jnp.float32) + vec_ref[5:6, :]   # (T, 2*IP)
    xp = ig[:, :IP]
    gate = ig[:, IP:]
    act = xp * jax.nn.sigmoid(xp) * gate                            # SiLU(xp) * gate
    y = jnp.dot(act.astype(jnp.bfloat16), wout_ref[...],
                preferred_element_type=jnp.float32) + vec_ref[4:5, :D]   # (T, D)

    o_ref[...] = _layernorm(y + h1, vec_ref[2:3, :D], vec_ref[3:4, :D], LN_EPS)


def shared_subspace_encoder_layer(x, packed):
    """x: (B, T, D) float32. Returns (B, T, D) float32."""
    out = pl.pallas_call(
        _layer_kernel,
        out_shape=jax.ShapeDtypeStruct((M, D), jnp.float32),
        grid=(B,),
        in_specs=[
            pl.BlockSpec((T, D), lambda b: (b, 0)),                   # x rows
            pl.BlockSpec((D, DQ + DKV), lambda b: (0, 0)),            # wa
            pl.BlockSpec((DQ + DKV, 2 * QK + HD), lambda b: (0, 0)),  # w_qkv
            pl.BlockSpec((T, 2 * QK), lambda b: (0, 0)),              # cos|sin
            pl.BlockSpec((HD, D), lambda b: (0, 0)),                  # w_o
            pl.BlockSpec((D, 2 * IP), lambda b: (0, 0)),              # w_ig
            pl.BlockSpec((IP, D), lambda b: (0, 0)),                  # w_out
            pl.BlockSpec((8, 2 * IP), lambda b: (0, 0)),              # ln/bias slab
        ],
        out_specs=pl.BlockSpec((T, D), lambda b: (b, 0)),
        compiler_params=pltpu.CompilerParams(
            dimension_semantics=("parallel",)),
    )(x.reshape(M, D), packed['wa'], packed['w_qkv'], packed['cossin'],
      packed['w_o'], packed['w_ig'], packed['w_out'], packed['vecs'])
    return out.reshape(B, T, D)


# ---------------- host-side parameter fusion / packing ----------------
def pack_params(p, emb):
    f32 = np.float32
    rms_w = np.asarray(p['rms_w'], f32)[0]                       # (DQ+DKV,)

    # merged block-diagonal q_b | kv_b weight, lane-tile-aligned column order
    # [ q|k | rotate_half(q|k) | v ]; RMS weight folded into rows, attention
    # scale DH**-0.5 folded into the q columns (and hence into rot(q) too).
    w_qk = np.zeros((DQ + DKV, QK), f32)
    w_qk[:DQ, :HD] = np.asarray(p['wqb_t'], f32)                 # q
    w_qk[DQ:, HD:] = np.asarray(p['wkvb_t'], f32)[:, :HD]        # k
    w_v = np.zeros((DQ + DKV, HD), f32)
    w_v[DQ:, :] = np.asarray(p['wkvb_t'], f32)[:, HD:]           # v
    w_qk *= rms_w[:, None]
    w_v *= rms_w[:, None]
    w_qk[:, :HD] *= DH ** -0.5

    # rotate_half as extra output columns (per-head block rotation, zero on
    # the pass-through dims) so RoPE rides inside the projection matmul.
    Rh = np.zeros((DH, DH), f32)
    half = ROPE // 2
    for i in range(half):
        Rh[i + half, i] = -1.0   # rot[i]        = -x[i + half]
        Rh[i, i + half] = 1.0    # rot[i + half] =  x[i]
    R = np.kron(np.eye(2 * H, dtype=f32), Rh)                    # (2*H*DH, 2*H*DH)
    w_qkv = np.concatenate([w_qk, w_qk @ R, w_v], axis=1)        # (DQ+DKV, 2*QK+HD)

    # RoPE tables: batch-invariant (T, 256) slab, cos lanes 0-127 / sin 128-255.
    cos_head = np.concatenate([np.cos(emb), np.ones((T, DH - ROPE), f32)], -1)
    sin_head = np.concatenate([np.sin(emb), np.zeros((T, DH - ROPE), f32)], -1)
    cossin = np.concatenate([np.tile(cos_head, (1, 2 * H)),
                             np.tile(sin_head, (1, 2 * H))], axis=-1).astype(f32)

    # pre-fused low-rank chains, FFN weights padded to 128-lane-aligned tiles
    w_o = np.asarray(p['woa_t'], f32) @ np.asarray(p['wob_t'], f32)      # (H*DH, D)
    w_in = np.asarray(p['wis_t'], f32) @ np.asarray(p['win_t'], f32)     # (D, I)
    w_gate = np.asarray(p['wgs_t'], f32) @ np.asarray(p['wg_t'], f32)    # (D, I)
    w_ig = np.zeros((D, 2 * IP), f32)
    w_ig[:, :I] = w_in
    w_ig[:, IP:IP + I] = w_gate
    w_out = np.zeros((IP, D), f32)
    w_out[:I, :] = np.asarray(p['wo_t'], f32) @ np.asarray(p['wos_t'], f32)

    # all small vectors merged into one padded f32 slab (one DMA descriptor)
    vecs = np.zeros((8, 2 * IP), f32)
    vecs[0, :D] = np.asarray(p['ln1_w'], f32)[0]
    vecs[1, :D] = np.asarray(p['ln1_b'], f32)[0]
    vecs[2, :D] = np.asarray(p['ln2_w'], f32)[0]
    vecs[3, :D] = np.asarray(p['ln2_b'], f32)[0]
    vecs[4, :D] = np.asarray(p['b_os'], f32)[0]
    vecs[5, :I] = np.asarray(p['b_in'], f32)[0]
    vecs[5, IP:IP + I] = np.asarray(p['b_g'], f32)[0]

    return {
        'wa': jnp.asarray(np.asarray(p['wa_t'], f32), jnp.bfloat16),
        'w_qkv': jnp.asarray(w_qkv, jnp.bfloat16),
        'cossin': jnp.asarray(cossin),
        'w_o': jnp.asarray(w_o, jnp.bfloat16),
        'w_ig': jnp.asarray(w_ig, jnp.bfloat16),
        'w_out': jnp.asarray(w_out, jnp.bfloat16),
        'vecs': jnp.asarray(vecs),
    }


# ---------------- pure-JAX reference (mirrors the PyTorch forward) ----------------
def reference(x, p, cos_r, sin_r):
    lat = x @ p['wa_t']
    var = jnp.mean(lat ** 2, -1, keepdims=True)
    lat = lat * jax.lax.rsqrt(var + RMS_EPS) * p['rms_w'][0]
    q = lat[..., :DQ] @ p['wqb_t']
    kv = lat[..., DQ:] @ p['wkvb_t']
    k, v = kv[..., :H * DH], kv[..., H * DH:]

    def heads(z):
        return z.reshape(B, T, H, DH).transpose(0, 2, 1, 3)

    q, k, v = heads(q), heads(k), heads(v)

    def rope(z):
        zr, zp = z[..., :ROPE], z[..., ROPE:]
        rot = jnp.concatenate([-zr[..., ROPE // 2:], zr[..., :ROPE // 2]], -1)
        zr = zr * cos_r[None, None] + rot * sin_r[None, None]
        return jnp.concatenate([zr, zp], -1)

    q, k = rope(q), rope(k)
    s = jnp.einsum('bhqd,bhkd->bhqk', q, k) * (DH ** -0.5)
    attn = jnp.einsum('bhqk,bhkd->bhqd', jax.nn.softmax(s, -1), v)
    attn = attn.transpose(0, 2, 1, 3).reshape(B, T, H * DH)
    attn_out = attn @ p['woa_t'] @ p['wob_t']

    def ln(z, w, b):
        mu = jnp.mean(z, -1, keepdims=True)
        zc = z - mu
        var = jnp.mean(zc ** 2, -1, keepdims=True)
        return zc * jax.lax.rsqrt(var + LN_EPS) * w[0] + b[0]

    h1 = ln(attn_out + x, p['ln1_w'], p['ln1_b'])
    xp = h1 @ p['wis_t'] @ p['win_t'] + p['b_in'][0]
    g = h1 @ p['wgs_t'] @ p['wg_t'] + p['b_g'][0]
    a = jax.nn.silu(xp) * g
    y = a @ p['wo_t'] @ p['wos_t'] + p['b_os'][0]
    return ln(y + h1, p['ln2_w'], p['ln2_b'])


if __name__ == "__main__":
    key = jax.random.PRNGKey(0)
    keys = jax.random.split(key, 16)

    def lin_t(k, out_dim, in_dim):   # nn.Linear weight (out,in), stored transposed (in,out)
        return (jax.random.normal(k, (out_dim, in_dim), jnp.float32) * 0.02).T

    params = {
        'wa_t':   lin_t(keys[0], DQ + DKV, D),           # qkv_a_proj (no bias)
        'rms_w':  jnp.ones((1, DQ + DKV), jnp.float32),  # qkv_a_layernorm weight
        'wqb_t':  lin_t(keys[1], H * DH, DQ),            # q_b_proj
        'wkvb_t': lin_t(keys[2], H * 2 * DH, DKV),       # kv_b_proj
        'woa_t':  lin_t(keys[3], DO, H * DH),            # o_a_proj
        'wob_t':  lin_t(keys[4], D, DO),                 # o_b_proj (no bias)
        'ln1_w':  jnp.ones((1, D), jnp.float32),         # attn_norm
        'ln1_b':  jnp.zeros((1, D), jnp.float32),
        'wis_t':  lin_t(keys[5], RF, D),                 # W_in_shared (no bias)
        'win_t':  lin_t(keys[6], I, RF),                 # W_in
        'b_in':   jax.random.normal(keys[7], (1, I), jnp.float32) * 0.02,
        'wgs_t':  lin_t(keys[8], RF, D),                 # W_gate_shared (no bias)
        'wg_t':   lin_t(keys[9], I, RF),                 # W_gate
        'b_g':    jax.random.normal(keys[10], (1, I), jnp.float32) * 0.02,
        'wo_t':   lin_t(keys[11], RF, I),                # W_out (no bias)
        'wos_t':  lin_t(keys[12], D, RF),                # W_out_shared
        'b_os':   jax.random.normal(keys[13], (1, D), jnp.float32) * 0.02,
        'ln2_w':  jnp.ones((1, D), jnp.float32),         # mlp.norm
        'ln2_b':  jnp.zeros((1, D), jnp.float32),
    }

    # RoPE tables (position_embeddings)
    inv_freq = 1.0 / (ROPE_THETA ** (np.arange(0, ROPE, 2, dtype=np.float32) / ROPE))
    pos = np.arange(T, dtype=np.float32)
    freqs = np.outer(pos, inv_freq)
    emb = np.concatenate([freqs, freqs], axis=-1)        # (T, ROPE)
    cos_r = jnp.asarray(np.cos(emb))
    sin_r = jnp.asarray(np.sin(emb))

    packed = pack_params(params, emb)
    x = jax.random.normal(keys[15], (B, T, D), jnp.float32)

    # TODO(synk): attention_mask is Optional in the module; this kernel covers the
    # attention_mask=None path (a mask would be one extra lane-aligned packed input).
    out = jax.block_until_ready(shared_subspace_encoder_layer(x, packed))
    ref = jax.block_until_ready(reference(x, params, cos_r, sin_r))
    max_err = float(jnp.max(jnp.abs(out - ref)))
    assert np.isfinite(max_err) and max_err < 5e-2, f"mismatch: max_err={max_err}"

    print("KERNEL_OK")
</pallas_src>

<mosaic_0001>
module attributes {stable_mosaic.version = 11 : i64} {
  func.func @_layer_kernel(%arg0: i32, %arg1: memref<8x32xf32, #tpu.memory_space<vmem>>, %arg2: memref<32x32xbf16, #tpu.memory_space<vmem>>, %arg3: memref<32x320xbf16, #tpu.memory_space<vmem>>, %arg4: memref<8x256xf32, #tpu.memory_space<vmem>>, %arg5: memref<64x32xbf16, #tpu.memory_space<vmem>>, %arg6: memref<32x256xbf16, #tpu.memory_space<vmem>>, %arg7: memref<128x32xbf16, #tpu.memory_space<vmem>>, %arg8: memref<8x256xf32, #tpu.memory_space<vmem>>, %arg9: memref<8x32xf32, #tpu.memory_space<vmem>>) attributes {dimension_semantics = [#tpu.dimension_semantics<parallel>], iteration_bounds = array<i64: 2>, scalar_prefetch = 0 : i64, scratch_operands = 0 : i64, tpu.core_type = #tpu.core_type<tc>, window_params = [{transform_indices = @transform_0, window_bounds = array<i64: 8, 32>}, {pipeline_mode = #tpu.pipeline_mode<synchronous>, transform_indices = @transform_1, window_bounds = array<i64: 32, 32>}, {pipeline_mode = #tpu.pipeline_mode<synchronous>, transform_indices = @transform_2, window_bounds = array<i64: 32, 320>}, {pipeline_mode = #tpu.pipeline_mode<synchronous>, transform_indices = @transform_3, window_bounds = array<i64: 8, 256>}, {pipeline_mode = #tpu.pipeline_mode<synchronous>, transform_indices = @transform_4, window_bounds = array<i64: 64, 32>}, {pipeline_mode = #tpu.pipeline_mode<synchronous>, transform_indices = @transform_5, window_bounds = array<i64: 32, 256>}, {pipeline_mode = #tpu.pipeline_mode<synchronous>, transform_indices = @transform_6, window_bounds = array<i64: 128, 32>}, {pipeline_mode = #tpu.pipeline_mode<synchronous>, transform_indices = @transform_7, window_bounds = array<i64: 8, 256>}, {transform_indices = @transform_8, window_bounds = array<i64: 8, 32>}]} {
    %c0 = arith.constant 0 : index
    %c0_0 = arith.constant 0 : index
    %0 = vector.load %arg1[%c0, %c0_0] : memref<8x32xf32, #tpu.memory_space<vmem>>, vector<8x32xf32>
    %1 = arith.truncf %0 : vector<8x32xf32> to vector<8x32xbf16>
    %c0_1 = arith.constant 0 : index
    %c0_2 = arith.constant 0 : index
    %2 = vector.load %arg2[%c0_1, %c0_2] : memref<32x32xbf16, #tpu.memory_space<vmem>>, vector<32x32xbf16>
    %cst = arith.constant dense<0.000000e+00> : vector<8x32xf32>
    %3 = tpu.matmul %1, %2, %cst {dimension_numbers = #tpu.dot_dimension_numbers<[1], [0], [0], [1], [0, 0, 1, 1], [], []>} : vector<8x32xbf16>, vector<32x32xbf16>, vector<8x32xf32> -> vector<8x32xf32>
    %4 = arith.mulf %3, %3 : vector<8x32xf32>
    %cst_3 = arith.constant dense<0.000000e+00> : vector<8xf32>
    %5 = vector.multi_reduction <add>, %4, %cst_3 [1] : vector<8x32xf32> to vector<8xf32>
    %6 = vector.shape_cast %5 : vector<8xf32> to vector<8x1xf32>
    %cst_4 = arith.constant 3.200000e+01 : f32
    %7 = vector.broadcast %cst_4 : f32 to vector<8x1xf32>
    %8 = arith.divf %6, %7 : vector<8x1xf32>
    %cst_5 = arith.constant 9.99999997E-7 : f32
    %9 = vector.broadcast %cst_5 : f32 to vector<8x1xf32>
    %10 = arith.addf %8, %9 : vector<8x1xf32>
    %11 = math.rsqrt %10 : vector<8x1xf32>
    %12 = vector.broadcast %11 : vector<8x1xf32> to vector<8x32xf32>
    %13 = arith.mulf %3, %12 : vector<8x32xf32>
    %14 = arith.truncf %13 : vector<8x32xf32> to vector<8x32xbf16>
    %c0_6 = arith.constant 0 : index
    %c0_7 = arith.constant 0 : index
    %15 = vector.load %arg3[%c0_6, %c0_7] : memref<32x320xbf16, #tpu.memory_space<vmem>>, vector<32x320xbf16>
    %cst_8 = arith.constant dense<0.000000e+00> : vector<8x320xf32>
    %16 = tpu.matmul %14, %15, %cst_8 {dimension_numbers = #tpu.dot_dimension_numbers<[1], [0], [0], [1], [0, 0, 1, 1], [], []>} : vector<8x32xbf16>, vector<32x320xbf16>, vector<8x320xf32> -> vector<8x320xf32>
    %c0_9 = arith.constant 0 : index
    %c0_10 = arith.constant 0 : index
    %17 = vector.load %arg4[%c0_9, %c0_10] : memref<8x256xf32, #tpu.memory_space<vmem>>, vector<8x128xf32>
    %c0_11 = arith.constant 0 : index
    %c128 = arith.constant 128 : index
    %18 = vector.load %arg4[%c0_11, %c128] : memref<8x256xf32, #tpu.memory_space<vmem>>, vector<8x128xf32>
    %19 = vector.extract_strided_slice %16 {offsets = [0, 0], sizes = [8, 128], strides = [1, 1]} : vector<8x320xf32> to vector<8x128xf32>
    %20 = arith.mulf %19, %17 : vector<8x128xf32>
    %21 = vector.extract_strided_slice %16 {offsets = [0, 128], sizes = [8, 128], strides = [1, 1]} : vector<8x320xf32> to vector<8x128xf32>
    %22 = arith.mulf %21, %18 : vector<8x128xf32>
    %23 = arith.addf %20, %22 : vector<8x128xf32>
    %24 = vector.extract_strided_slice %16 {offsets = [0, 256], sizes = [8, 64], strides = [1, 1]} : vector<8x320xf32> to vector<8x64xf32>
    %25 = vector.extract_strided_slice %23 {offsets = [0, 0], sizes = [8, 64], strides = [1, 1]} : vector<8x128xf32> to vector<8x64xf32>
    %26 = vector.shape_cast %25 : vector<8x64xf32> to vector<8x4x16xf32>
    %27 = tpu.transpose %26, [1, 0, 2] : vector<8x4x16xf32> -> vector<4x8x16xf32>
    %28 = arith.truncf %27 : vector<4x8x16xf32> to vector<4x8x16xbf16>
    %29 = vector.extract_strided_slice %23 {offsets = [0, 64], sizes = [8, 64], strides = [1, 1]} : vector<8x128xf32> to vector<8x64xf32>
    %30 = vector.shape_cast %29 : vector<8x64xf32> to vector<8x4x16xf32>
    %31 = tpu.transpose %30, [1, 0, 2] : vector<8x4x16xf32> -> vector<4x8x16xf32>
    %32 = arith.truncf %31 : vector<4x8x16xf32> to vector<4x8x16xbf16>
    %33 = vector.shape_cast %24 : vector<8x64xf32> to vector<8x4x16xf32>
    %34 = tpu.transpose %33, [1, 0, 2] : vector<8x4x16xf32> -> vector<4x8x16xf32>
    %35 = arith.truncf %34 : vector<4x8x16xf32> to vector<4x8x16xbf16>
    "tpu.trace_start"() <{level = 10 : i32, message = "hqd,hkd->hqk"}> : () -> ()
    %cst_12 = arith.constant dense<0.000000e+00> : vector<4x8x8xf32>
    %36 = tpu.matmul %28, %32, %cst_12 {dimension_numbers = #tpu.dot_dimension_numbers<[2], [2], [1], [1], [0, 0, 0, 1, 1, 1], [0], [0]>} : vector<4x8x16xbf16>, vector<4x8x16xbf16>, vector<4x8x8xf32> -> vector<4x8x8xf32>
    "tpu.trace_stop"() : () -> ()
    %cst_13 = arith.constant dense<0xFF800000> : vector<4x8xf32>
    %37 = vector.multi_reduction <maximumf>, %36, %cst_13 [2] : vector<4x8x8xf32> to vector<4x8xf32>
    %38 = vector.shape_cast %37 : vector<4x8xf32> to vector<4x8x1xf32>
    %39 = vector.broadcast %38 : vector<4x8x1xf32> to vector<4x8x8xf32>
    %40 = arith.subf %36, %39 : vector<4x8x8xf32>
    %41 = math.exp %40 : vector<4x8x8xf32>
    %cst_14 = arith.constant dense<0.000000e+00> : vector<4x8xf32>
    %42 = vector.multi_reduction <add>, %41, %cst_14 [2] : vector<4x8x8xf32> to vector<4x8xf32>
    %43 = vector.shape_cast %42 : vector<4x8xf32> to vector<4x8x1xf32>
    %44 = tpu.reciprocal %43 {approx = true} : vector<4x8x1xf32> -> vector<4x8x1xf32>
    %45 = vector.broadcast %44 : vector<4x8x1xf32> to vector<4x8x8xf32>
    %46 = arith.mulf %41, %45 : vector<4x8x8xf32>
    %47 = arith.truncf %46 : vector<4x8x8xf32> to vector<4x8x8xbf16>
    "tpu.trace_start"() <{level = 10 : i32, message = "hqk,hkd->hqd"}> : () -> ()
    %cst_15 = arith.constant dense<0.000000e+00> : vector<4x8x16xf32>
    %48 = tpu.matmul %47, %35, %cst_15 {dimension_numbers = #tpu.dot_dimension_numbers<[2], [1], [1], [2], [0, 0, 0, 1, 1, 2], [0], [0]>} : vector<4x8x8xbf16>, vector<4x8x16xbf16>, vector<4x8x16xf32> -> vector<4x8x16xf32>
    "tpu.trace_stop"() : () -> ()
    %49 = tpu.transpose %48, [1, 0, 2] : vector<4x8x16xf32> -> vector<8x4x16xf32>
    %50 = vector.shape_cast %49 : vector<8x4x16xf32> to vector<8x64xf32>
    %51 = arith.truncf %50 : vector<8x64xf32> to vector<8x64xbf16>
    %c0_16 = arith.constant 0 : index
    %c0_17 = arith.constant 0 : index
    %52 = vector.load %arg5[%c0_16, %c0_17] : memref<64x32xbf16, #tpu.memory_space<vmem>>, vector<64x32xbf16>
    %cst_18 = arith.constant dense<0.000000e+00> : vector<8x32xf32>
    %53 = tpu.matmul %51, %52, %cst_18 {dimension_numbers = #tpu.dot_dimension_numbers<[1], [0], [0], [1], [0, 0, 1, 1], [], []>} : vector<8x64xbf16>, vector<64x32xbf16>, vector<8x32xf32> -> vector<8x32xf32>
    %54 = arith.addf %53, %0 : vector<8x32xf32>
    %c0_19 = arith.constant 0 : index
    %c0_20 = arith.constant 0 : index
    %55 = vector.load %arg8[%c0_19, %c0_20] : memref<8x256xf32, #tpu.memory_space<vmem>>, vector<1x32xf32>
    %c1 = arith.constant 1 : index
    %c0_21 = arith.constant 0 : index
    %56 = vector.load %arg8[%c1, %c0_21] : memref<8x256xf32, #tpu.memory_space<vmem>>, vector<1x32xf32>
    %cst_22 = arith.constant dense<0.000000e+00> : vector<8xf32>
    %57 = vector.multi_reduction <add>, %54, %cst_22 [1] : vector<8x32xf32> to vector<8xf32>
    %58 = vector.shape_cast %57 : vector<8xf32> to vector<8x1xf32>
    %cst_23 = arith.constant 3.200000e+01 : f32
    %59 = vector.broadcast %cst_23 : f32 to vector<8x1xf32>
    %60 = arith.divf %58, %59 : vector<8x1xf32>
    %61 = vector.broadcast %60 : vector<8x1xf32> to vector<8x32xf32>
    %62 = arith.subf %54, %61 : vector<8x32xf32>
    %63 = arith.mulf %62, %62 : vector<8x32xf32>
    %cst_24 = arith.constant dense<0.000000e+00> : vector<8xf32>
    %64 = vector.multi_reduction <add>, %63, %cst_24 [1] : vector<8x32xf32> to vector<8xf32>
    %65 = vector.shape_cast %64 : vector<8xf32> to vector<8x1xf32>
    %cst_25 = arith.constant 3.200000e+01 : f32
    %66 = vector.broadcast %cst_25 : f32 to vector<8x1xf32>
    %67 = arith.divf %65, %66 : vector<8x1xf32>
    %cst_26 = arith.constant 9.99999996E-13 : f32
    %68 = vector.broadcast %cst_26 : f32 to vector<8x1xf32>
    %69 = arith.addf %67, %68 : vector<8x1xf32>
    %70 = math.rsqrt %69 : vector<8x1xf32>
    %71 = vector.broadcast %70 : vector<8x1xf32> to vector<8x32xf32>
    %72 = arith.mulf %62, %71 : vector<8x32xf32>
    %73 = vector.broadcast %55 : vector<1x32xf32> to vector<8x32xf32>
    %74 = arith.mulf %72, %73 : vector<8x32xf32>
    %75 = vector.broadcast %56 : vector<1x32xf32> to vector<8x32xf32>
    %76 = arith.addf %74, %75 : vector<8x32xf32>
    %77 = arith.truncf %76 : vector<8x32xf32> to vector<8x32xbf16>
    %c0_27 = arith.constant 0 : index
    %c0_28 = arith.constant 0 : index
    %78 = vector.load %arg6[%c0_27, %c0_28] : memref<32x256xbf16, #tpu.memory_space<vmem>>, vector<32x256xbf16>
    %cst_29 = arith.constant dense<0.000000e+00> : vector<8x256xf32>
    %79 = tpu.matmul %77, %78, %cst_29 {dimension_numbers = #tpu.dot_dimension_numbers<[1], [0], [0], [1], [0, 0, 1, 1], [], []>} : vector<8x32xbf16>, vector<32x256xbf16>, vector<8x256xf32> -> vector<8x256xf32>
    %c5 = arith.constant 5 : index
    %c0_30 = arith.constant 0 : index
    %80 = vector.load %arg8[%c5, %c0_30] : memref<8x256xf32, #tpu.memory_space<vmem>>, vector<1x256xf32>
    %81 = vector.broadcast %80 : vector<1x256xf32> to vector<8x256xf32>
    %82 = arith.addf %79, %81 : vector<8x256xf32>
    %83 = vector.extract_strided_slice %82 {offsets = [0, 0], sizes = [8, 128], strides = [1, 1]} : vector<8x256xf32> to vector<8x128xf32>
    %84 = vector.extract_strided_slice %82 {offsets = [0, 128], sizes = [8, 128], strides = [1, 1]} : vector<8x256xf32> to vector<8x128xf32>
    %85 = arith.negf %83 : vector<8x128xf32>
    %86 = math.exp %85 : vector<8x128xf32>
    %cst_31 = arith.constant 1.000000e+00 : f32
    %87 = vector.broadcast %cst_31 : f32 to vector<8x128xf32>
    %88 = arith.addf %87, %86 : vector<8x128xf32>
    %89 = arith.divf %87, %88 : vector<8x128xf32>
    %90 = arith.mulf %83, %89 : vector<8x128xf32>
    %91 = arith.mulf %90, %84 : vector<8x128xf32>
    %92 = arith.truncf %91 : vector<8x128xf32> to vector<8x128xbf16>
    %c0_32 = arith.constant 0 : index
    %c0_33 = arith.constant 0 : index
    %93 = vector.load %arg7[%c0_32, %c0_33] : memref<128x32xbf16, #tpu.memory_space<vmem>>, vector<128x32xbf16>
    %cst_34 = arith.constant dense<0.000000e+00> : vector<8x32xf32>
    %94 = tpu.matmul %92, %93, %cst_34 {dimension_numbers = #tpu.dot_dimension_numbers<[1], [0], [0], [1], [0, 0, 1, 1], [], []>} : vector<8x128xbf16>, vector<128x32xbf16>, vector<8x32xf32> -> vector<8x32xf32>
    %c4 = arith.constant 4 : index
    %c0_35 = arith.constant 0 : index
    %95 = vector.load %arg8[%c4, %c0_35] : memref<8x256xf32, #tpu.memory_space<vmem>>, vector<1x32xf32>
    %96 = vector.broadcast %95 : vector<1x32xf32> to vector<8x32xf32>
    %97 = arith.addf %94, %96 : vector<8x32xf32>
    %98 = arith.addf %97, %76 : vector<8x32xf32>
    %c2 = arith.constant 2 : index
    %c0_36 = arith.constant 0 : index
    %99 = vector.load %arg8[%c2, %c0_36] : memref<8x256xf32, #tpu.memory_space<vmem>>, vector<1x32xf32>
    %c3 = arith.constant 3 : index
    %c0_37 = arith.constant 0 : index
    %100 = vector.load %arg8[%c3, %c0_37] : memref<8x256xf32, #tpu.memory_space<vmem>>, vector<1x32xf32>
    %cst_38 = arith.constant dense<0.000000e+00> : vector<8xf32>
    %101 = vector.multi_reduction <add>, %98, %cst_38 [1] : vector<8x32xf32> to vector<8xf32>
    %102 = vector.shape_cast %101 : vector<8xf32> to vector<8x1xf32>
    %cst_39 = arith.constant 3.200000e+01 : f32
    %103 = vector.broadcast %cst_39 : f32 to vector<8x1xf32>
    %104 = arith.divf %102, %103 : vector<8x1xf32>
    %105 = vector.broadcast %104 : vector<8x1xf32> to vector<8x32xf32>
    %106 = arith.subf %98, %105 : vector<8x32xf32>
    %107 = arith.mulf %106, %106 : vector<8x32xf32>
    %cst_40 = arith.constant dense<0.000000e+00> : vector<8xf32>
    %108 = vector.multi_reduction <add>, %107, %cst_40 [1] : vector<8x32xf32> to vector<8xf32>
    %109 = vector.shape_cast %108 : vector<8xf32> to vector<8x1xf32>
    %cst_41 = arith.constant 3.200000e+01 : f32
    %110 = vector.broadcast %cst_41 : f32 to vector<8x1xf32>
    %111 = arith.divf %109, %110 : vector<8x1xf32>
    %cst_42 = arith.constant 9.99999996E-13 : f32
    %112 = vector.broadcast %cst_42 : f32 to vector<8x1xf32>
    %113 = arith.addf %111, %112 : vector<8x1xf32>
    %114 = math.rsqrt %113 : vector<8x1xf32>
    %115 = vector.broadcast %114 : vector<8x1xf32> to vector<8x32xf32>
    %116 = arith.mulf %106, %115 : vector<8x32xf32>
    %117 = vector.broadcast %99 : vector<1x32xf32> to vector<8x32xf32>
    %118 = arith.mulf %116, %117 : vector<8x32xf32>
    %119 = vector.broadcast %100 : vector<1x32xf32> to vector<8x32xf32>
    %120 = arith.addf %118, %119 : vector<8x32xf32>
    %c0_43 = arith.constant 0 : index
    %c0_44 = arith.constant 0 : index
    %121 = vector.load %arg9[%c0_43, %c0_44] : memref<8x32xf32, #tpu.memory_space<vmem>>, vector<8x32xf32>
    tpu.vector_store %arg9[%c0_43, %c0_44], %120 {strides = array<i32>} : memref<8x32xf32, #tpu.memory_space<vmem>>, vector<8x32xf32>,
    return
  }
  func.func @transform_0(%arg0: i32) -> (i32, i32) {
    %c0_i32 = arith.constant 0 : i32
    %c0_i32_0 = arith.constant 0 : i32
    return %arg0, %c0_i32 : i32, i32
  }
  func.func @transform_1(%arg0: i32) -> (i32, i32) {
    %c0_i32 = arith.constant 0 : i32
    %c0_i32_0 = arith.constant 0 : i32
    %c0_i32_1 = arith.constant 0 : i32
    return %c0_i32, %c0_i32_0 : i32, i32
  }
  func.func @transform_2(%arg0: i32) -> (i32, i32) {
    %c0_i32 = arith.constant 0 : i32
    %c0_i32_0 = arith.constant 0 : i32
    %c0_i32_1 = arith.constant 0 : i32
    return %c0_i32, %c0_i32_0 : i32, i32
  }
  func.func @transform_3(%arg0: i32) -> (i32, i32) {
    %c0_i32 = arith.constant 0 : i32
    %c0_i32_0 = arith.constant 0 : i32
    %c0_i32_1 = arith.constant 0 : i32
    return %c0_i32, %c0_i32_0 : i32, i32
  }
  func.func @transform_4(%arg0: i32) -> (i32, i32) {
    %c0_i32 = arith.constant 0 : i32
    %c0_i32_0 = arith.constant 0 : i32
    %c0_i32_1 = arith.constant 0 : i32
    return %c0_i32, %c0_i32_0 : i32, i32
  }
  func.func @transform_5(%arg0: i32) -> (i32, i32) {
    %c0_i32 = arith.constant 0 : i32
    %c0_i32_0 = arith.constant 0 : i32
    %c0_i32_1 = arith.constant 0 : i32
    return %c0_i32, %c0_i32_0 : i32, i32
  }
  func.func @transform_6(%arg0: i32) -> (i32, i32) {
    %c0_i32 = arith.constant 0 : i32
    %c0_i32_0 = arith.constant 0 : i32
    %c0_i32_1 = arith.constant 0 : i32
    return %c0_i32, %c0_i32_0 : i32, i32
  }
  func.func @transform_7(%arg0: i32) -> (i32, i32) {
    %c0_i32 = arith.constant 0 : i32
    %c0_i32_0 = arith.constant 0 : i32
    %c0_i32_1 = arith.constant 0 : i32
    return %c0_i32, %c0_i32_0 : i32, i32
  }
  func.func @transform_8(%arg0: i32) -> (i32, i32) {
    %c0_i32 = arith.constant 0 : i32
    %c0_i32_0 = arith.constant 0 : i32
    return %arg0, %c0_i32 : i32, i32
  }
}

</mosaic_0001>

<llo_original>
// kernel: tpu_custom_call.1
$region0: #{tpu_custom_call.1}
  #allocation0 [shape = 'u32[]', space=smem, size = 0x4, offset = 0x4, fixed_abs, tag = 'smem constant byte address 0x4 - core index']
  #allocation1 [shape = 'u32[144,128]{1,0:T(1,128)}', space=vmem, size = 0x12000, scoped, tag = 'internal scratch']
  %s0 = inlined_call_operand.vmem [shape: f32[16,32], index: 0, kind: input, shape index: {}]
  %s1 = inlined_call_operand.vmem [shape: bf16[32,32], index: 1, kind: input, shape index: {}]
  %s2 = inlined_call_operand.vmem [shape: bf16[32,320], index: 2, kind: input, shape index: {}]
  %s3 = inlined_call_operand.vmem [shape: f32[8,256], index: 3, kind: input, shape index: {}]
  %s4 = inlined_call_operand.vmem [shape: bf16[64,32], index: 4, kind: input, shape index: {}]
  %s5 = inlined_call_operand.vmem [shape: bf16[32,256], index: 5, kind: input, shape index: {}]
  %s6 = inlined_call_operand.vmem [shape: bf16[128,32], index: 6, kind: input, shape index: {}]
  %s7 = inlined_call_operand.hbm [shape: f32[8,256], index: 7, kind: input, shape index: {}]
  %s8 = inlined_call_operand.hbm [shape: f32[16,32], index: 8, kind: output, shape index: {}]
  %s9 = sld [smem:[#allocation0]]
  $region69: #{tpu_custom_call.1} parent=0
    _
  %s11 = ssub.s32 1, %s9
  %s12 = scalar_select 0, %s11, %s9
  $region1: #{tpu_custom_call.1} parent=0
    #allocation2 [shape = 'u8[8192]{0}', space=vmem, size = 0x2000, scoped, tag = 'input window, operand 7, single buffered']
    #allocation3 [shape = 's32[2]{0}', space=sflag, size = 0x8, scoped, tag = 'scoped memory for tpu_custom_call.1']
    #allocation4 [shape = 's32[2]{0}', space=sflag, size = 0x8, scoped, tag = 'scoped memory for tpu_custom_call.1']
    #allocation5 [shape = 'u8[8192]{0}', space=vmem, size = 0x2000, scoped, tag = 'output window, operand 0']
    %13 = vsyncpa [#allocation3], 0
    %14 = vsyncpa [#allocation4], 0
    %s15 = scalar_lea.sflag [#allocation4], 1
    %16 = vsyncpa %s15, 0
    loop: start=0, step=1, limit=4
    $region2: #{tpu_custom_call.1} parent=1 // loop_pre_header
      _
    $region3: #{tpu_custom_call.1} parent=1 // loop_header
      %s18 = sphi 0, %s22
      %p19 = scmp.ge.s32.totalorder %s18, 4
      %s28 = sphi 0, %s30
      %s31 = sphi 0, %s28
      %s32 = sphi 0, %s31
      %s48 = sphi 0, %s32
      %s52 = sphi 0, %s52
      %s54 = sphi 0, %s52
      %s55 = sphi 0, %s54
      %s69 = sphi 0, %s55
      %s73 = sphi 0, %s73
      %s75 = sphi 0, %s73
      %s76 = sphi 0, %s75
      %s90 = sphi 0, %s76
      %s94 = sphi 0, %s94
      %s96 = sphi 0, %s94
      %s97 = sphi 0, %s96
      %s111 = sphi 0, %s97
      %s115 = sphi 0, %s115
      %s117 = sphi 0, %s115
      %s118 = sphi 0, %s117
      %s132 = sphi 0, %s118
      %s136 = sphi 0, %s136
      %s138 = sphi 0, %s136
      %s139 = sphi 0, %s138
      %s153 = sphi 0, %s139
      %s157 = sphi 0, %s157
      %s159 = sphi 0, %s157
      %s160 = sphi 0, %s159
      %s174 = sphi 0, %s160
      %s178 = sphi 0, %s178
      %s180 = sphi 0, %s178
      %s181 = sphi 0, %s180
      %s195 = sphi 0, %s181
      %s201 = sphi 0, %s203
      %s204 = sphi 0, %s201
      %s205 = sphi 0, %s204
      %s221 = sphi 0, %s205
    $region4: #{tpu_custom_call.1} parent=1 // loop_header_branch
      %21 = sbr.rel (%p19) target = $region8
    $region5: #{tpu_custom_call.1} parent=1 // loop_body
      %s23 = ssub.s32 %s18, 1
      %s24 = ssub.s32 %s18, 2
      %s25 = sadd.s32 %s18, 1
      %s26 = ssub.s32 %s18, %s25
      %p27 = scmp.eq.s32.totalorder %s26, 0
      %s29 = sadd.s32 %s28, 1
      %s30 = scalar_select %p27, %s28, %s29
      %p33 = pneg %p27
      %p34 = scmp.eq.s32.totalorder %s18, 1
      %p35 = por %p33, %p34
      %p36 = scmp.ne.s32.totalorder %s28, %s31
      %p37 = scmp.eq.s32.totalorder %s18, 0
      %p38 = por %p36, %p37
      %p39 = scmp.ne.s32.totalorder %s28, %s31
      %p40 = scmp.eq.s32.totalorder %s23, 1
      %p41 = por %p39, %p40
      %p42 = scmp.ne.s32.totalorder %s31, %s32
      %p43 = scmp.eq.s32.totalorder %s23, 0
      %p44 = por %p42, %p43
      %p45 = scmp.ne.s32.totalorder %s31, %s32
      %p46 = scmp.eq.s32.totalorder %s24, 1
      %p47 = por %p45, %p46
      %p49 = scmp.ne.s32.totalorder %s32, %s48
      %p50 = scmp.eq.s32.totalorder %s24, 0
      %p51 = por %p49, %p50
      %s53 = sadd.s32 %s52, 1
      %p56 = scmp.eq.s32.totalorder %s18, 1
      %p57 = scmp.ne.s32.totalorder %s52, %s54
      %p58 = scmp.eq.s32.totalorder %s18, 0
      %p59 = por %p57, %p58
      %p60 = scmp.ne.s32.totalorder %s52, %s54
      %p61 = scmp.eq.s32.totalorder %s23, 1
      %p62 = por %p60, %p61
      %p63 = scmp.ne.s32.totalorder %s54, %s55
      %p64 = scmp.eq.s32.totalorder %s23, 0
      %p65 = por %p63, %p64
      %p66 = scmp.ne.s32.totalorder %s54, %s55
      %p67 = scmp.eq.s32.totalorder %s24, 1
      %p68 = por %p66, %p67
      %p70 = scmp.ne.s32.totalorder %s55, %s69
      %p71 = scmp.eq.s32.totalorder %s24, 0
      %p72 = por %p70, %p71
      %s74 = sadd.s32 %s73, 1
      %p77 = scmp.eq.s32.totalorder %s18, 1
      %p78 = scmp.ne.s32.totalorder %s73, %s75
      %p79 = scmp.eq.s32.totalorder %s18, 0
      %p80 = por %p78, %p79
      %p81 = scmp.ne.s32.totalorder %s73, %s75
      %p82 = scmp.eq.s32.totalorder %s23, 1
      %p83 = por %p81, %p82
      %p84 = scmp.ne.s32.totalorder %s75, %s76
      %p85 = scmp.eq.s32.totalorder %s23, 0
      %p86 = por %p84, %p85
      %p87 = scmp.ne.s32.totalorder %s75, %s76
      %p88 = scmp.eq.s32.totalorder %s24, 1
      %p89 = por %p87, %p88
      %p91 = scmp.ne.s32.totalorder %s76, %s90
      %p92 = scmp.eq.s32.totalorder %s24, 0
      %p93 = por %p91, %p92
      %s95 = sadd.s32 %s94, 1
      %p98 = scmp.eq.s32.totalorder %s18, 1
      %p99 = scmp.ne.s32.totalorder %s94, %s96
      %p100 = scmp.eq.s32.totalorder %s18, 0
      %p101 = por %p99, %p100
      %p102 = scmp.ne.s32.totalorder %s94, %s96
      %p103 = scmp.eq.s32.totalorder %s23, 1
      %p104 = por %p102, %p103
      %p105 = scmp.ne.s32.totalorder %s96, %s97
      %p106 = scmp.eq.s32.totalorder %s23, 0
      %p107 = por %p105, %p106
      %p108 = scmp.ne.s32.totalorder %s96, %s97
      %p109 = scmp.eq.s32.totalorder %s24, 1
      %p110 = por %p108, %p109
      %p112 = scmp.ne.s32.totalorder %s97, %s111
      %p113 = scmp.eq.s32.totalorder %s24, 0
      %p114 = por %p112, %p113
      %s116 = sadd.s32 %s115, 1
      %p119 = scmp.eq.s32.totalorder %s18, 1
      %p120 = scmp.ne.s32.totalorder %s115, %s117
      %p121 = scmp.eq.s32.totalorder %s18, 0
      %p122 = por %p120, %p121
      %p123 = scmp.ne.s32.totalorder %s115, %s117
      %p124 = scmp.eq.s32.totalorder %s23, 1
      %p125 = por %p123, %p124
      %p126 = scmp.ne.s32.totalorder %s117, %s118
      %p127 = scmp.eq.s32.totalorder %s23, 0
      %p128 = por %p126, %p127
      %p129 = scmp.ne.s32.totalorder %s117, %s118
      %p130 = scmp.eq.s32.totalorder %s24, 1
      %p131 = por %p129, %p130
      %p133 = scmp.ne.s32.totalorder %s118, %s132
      %p134 = scmp.eq.s32.totalorder %s24, 0
      %p135 = por %p133, %p134
      %s137 = sadd.s32 %s136, 1
      %p140 = scmp.eq.s32.totalorder %s18, 1
      %p141 = scmp.ne.s32.totalorder %s136, %s138
      %p142 = scmp.eq.s32.totalorder %s18, 0
      %p143 = por %p141, %p142
      %p144 = scmp.ne.s32.totalorder %s136, %s138
      %p145 = scmp.eq.s32.totalorder %s23, 1
      %p146 = por %p144, %p145
      %p147 = scmp.ne.s32.totalorder %s138, %s139
      %p148 = scmp.eq.s32.totalorder %s23, 0
      %p149 = por %p147, %p148
      %p150 = scmp.ne.s32.totalorder %s138, %s139
      %p151 = scmp.eq.s32.totalorder %s24, 1
      %p152 = por %p150, %p151
      %p154 = scmp.ne.s32.totalorder %s139, %s153
      %p155 = scmp.eq.s32.totalorder %s24, 0
      %p156 = por %p154, %p155
      %s158 = sadd.s32 %s157, 1
      %p161 = scmp.eq.s32.totalorder %s18, 1
      %p162 = scmp.ne.s32.totalorder %s157, %s159
      %p163 = scmp.eq.s32.totalorder %s18, 0
      %p164 = por %p162, %p163
      %p165 = scmp.ne.s32.totalorder %s157, %s159
      %p166 = scmp.eq.s32.totalorder %s23, 1
      %p167 = por %p165, %p166
      %p168 = scmp.ne.s32.totalorder %s159, %s160
      %p169 = scmp.eq.s32.totalorder %s23, 0
      %p170 = por %p168, %p169
      %p171 = scmp.ne.s32.totalorder %s159, %s160
      %p172 = scmp.eq.s32.totalorder %s24, 1
      %p173 = por %p171, %p172
      %p175 = scmp.ne.s32.totalorder %s160, %s174
      %p176 = scmp.eq.s32.totalorder %s24, 0
      %p177 = por %p175, %p176
      %s179 = sadd.s32 %s178, 1
      %p182 = scmp.eq.s32.totalorder %s18, 1
      %p183 = scmp.ne.s32.totalorder %s178, %s180
      %p184 = scmp.eq.s32.totalorder %s18, 0
      %p185 = por %p183, %p184
      %p186 = scmp.ne.s32.totalorder %s178, %s180
      %p187 = scmp.eq.s32.totalorder %s23, 1
      %p188 = por %p186, %p187
      %p189 = scmp.ne.s32.totalorder %s180, %s181
      %p190 = scmp.eq.s32.totalorder %s23, 0
      %p191 = por %p189, %p190
      %p192 = scmp.ne.s32.totalorder %s180, %s181
      %p193 = scmp.eq.s32.totalorder %s24, 1
      %p194 = por %p192, %p193
      %p196 = scmp.ne.s32.totalorder %s181, %s195
      %p197 = scmp.eq.s32.totalorder %s24, 0
      %p198 = por %p196, %p197
      %s199 = ssub.s32 %s18, %s25
      %p200 = scmp.eq.s32.totalorder %s199, 0
      %s202 = sadd.s32 %s201, 1
      %s203 = scalar_select %p200, %s201, %s202
      %p206 = pneg %p200
      %p207 = scmp.eq.s32.totalorder %s18, 1
      %p208 = por %p206, %p207
      %p209 = scmp.ne.s32.totalorder %s201, %s204
      %p210 = scmp.eq.s32.totalorder %s18, 0
      %p211 = por %p209, %p210
      %p212 = scmp.ne.s32.totalorder %s201, %s204
      %p213 = scmp.eq.s32.totalorder %s23, 1
      %p214 = por %p212, %p213
      %p215 = scmp.ne.s32.totalorder %s204, %s205
      %p216 = scmp.eq.s32.totalorder %s23, 0
      %p217 = por %p215, %p216
      %p218 = scmp.ne.s32.totalorder %s204, %s205
      %p219 = scmp.eq.s32.totalorder %s24, 1
      %p220 = por %p218, %p219
      %p222 = scmp.ne.s32.totalorder %s205, %s221
      %p223 = scmp.eq.s32.totalorder %s24, 0
      %p224 = por %p222, %p223
      %p225 = scmp.le.s32.totalorder 1, %s18
      %p226 = scmp.lt.s32.totalorder %s18, 3
      %p227 = pnand %p225, %p226
      %p228 = pneg %p227
      // Predicated region
      $region9: #{tpu_custom_call.1} parent=5 // pred_check
        _
      $region10: #{tpu_custom_call.1} parent=5 // pred_check_branch
        %230 = sbr.rel (%p227) target = $region12
      $region11: #{tpu_custom_call.1} parent=5 // pred_region
        %s231 = ssub.s32 %s18, 1
        // Predicated region
        $region13: #{tpu_custom_call.1} parent=11 // pred_check
          %p232 = pneg %p65
        $region14: #{tpu_custom_call.1} parent=11 // pred_check_branch
          %234 = sbr.rel (%p232) target = $region16
        $region15: #{tpu_custom_call.1} parent=11 // pred_region
          _
        $region16: #{tpu_custom_call.1} parent=11 // pred_fallthru
          _
        // Predicated region
        $region17: #{tpu_custom_call.1} parent=11 // pred_check
          %p235 = pneg %p86
        $region18: #{tpu_custom_call.1} parent=11 // pred_check_branch
          %237 = sbr.rel (%p235) target = $region20
        $region19: #{tpu_custom_call.1} parent=11 // pred_region
          _
        $region20: #{tpu_custom_call.1} parent=11 // pred_fallthru
          _
        // Predicated region
        $region21: #{tpu_custom_call.1} parent=11 // pred_check
          %p238 = pneg %p107
        $region22: #{tpu_custom_call.1} parent=11 // pred_check_branch
          %240 = sbr.rel (%p238) target = $region24
        $region23: #{tpu_custom_call.1} parent=11 // pred_region
          _
        $region24: #{tpu_custom_call.1} parent=11 // pred_fallthru
          _
        // Predicated region
        $region25: #{tpu_custom_call.1} parent=11 // pred_check
          %p241 = pneg %p128
        $region26: #{tpu_custom_call.1} parent=11 // pred_check_branch
          %243 = sbr.rel (%p241) target = $region28
        $region27: #{tpu_custom_call.1} parent=11 // pred_region
          _
        $region28: #{tpu_custom_call.1} parent=11 // pred_fallthru
          _
        // Predicated region
        $region29: #{tpu_custom_call.1} parent=11 // pred_check
          %p244 = pneg %p149
        $region30: #{tpu_custom_call.1} parent=11 // pred_check_branch
          %246 = sbr.rel (%p244) target = $region32
        $region31: #{tpu_custom_call.1} parent=11 // pred_region
          _
        $region32: #{tpu_custom_call.1} parent=11 // pred_fallthru
          _
        // Predicated region
        $region33: #{tpu_custom_call.1} parent=11 // pred_check
          %p247 = pneg %p170
        $region34: #{tpu_custom_call.1} parent=11 // pred_check_branch
          %249 = sbr.rel (%p247) target = $region36
        $region35: #{tpu_custom_call.1} parent=11 // pred_region
          _
        $region36: #{tpu_custom_call.1} parent=11 // pred_fallthru
          _
        // Predicated region
        $region37: #{tpu_custom_call.1} parent=11 // pred_check
          %p250 = pneg %p191
        $region38: #{tpu_custom_call.1} parent=11 // pred_check_branch
          %252 = sbr.rel (%p250) target = $region40
        $region39: #{tpu_custom_call.1} parent=11 // pred_region
          %s254 = ssub.s32 256, 256
          %255 = vsyncadd [#allocation3], %s254
          %s257 = sshll.u32 [#allocation2], 4
          %s258 = int_to_ptr.vmem [resolvable:$true] %s257
          %260 = dma.hbm_to_vmem [thread:$0]  %s7, 256, %s258, [#allocation3]
        $region40: #{tpu_custom_call.1} parent=11 // pred_fallthru
          _
      $region12: #{tpu_custom_call.1} parent=5 // pred_fallthru
        _
      %p261 = scmp.lt.s32.totalorder %s18, 2
      // Predicated region
      $region41: #{tpu_custom_call.1} parent=5 // pred_check
        %p262 = pneg %p261
      $region42: #{tpu_custom_call.1} parent=5 // pred_check_branch
        %264 = sbr.rel (%p262) target = $region44
      $region43: #{tpu_custom_call.1} parent=5 // pred_region
        // Predicated region
        $region45: #{tpu_custom_call.1} parent=43 // pred_check
          %p265 = pneg %p38
        $region46: #{tpu_custom_call.1} parent=43 // pred_check_branch
          %267 = sbr.rel (%p265) target = $region48
        $region47: #{tpu_custom_call.1} parent=43 // pred_region
          %p268 = scmp.lt.s32.totalorder %s18, 1
          %s269 = scalar_select %p268, %s18, 1
          %s270 = smul.addr %s269, 8
          %s271 = scalar_lea.vmem %s0, %s270
        $region48: #{tpu_custom_call.1} parent=43 // pred_fallthru
          _
      $region44: #{tpu_custom_call.1} parent=5 // pred_fallthru
        _
      %p272 = scmp.le.s32.totalorder 1, %s18
      %p273 = scmp.lt.s32.totalorder %s18, 3
      %p274 = pnand %p272, %p273
      %p275 = pneg %p274
      // Predicated region
      $region49: #{tpu_custom_call.1} parent=5 // pred_check
        _
      $region50: #{tpu_custom_call.1} parent=5 // pred_check_branch
        %277 = sbr.rel (%p274) target = $region52
      $region51: #{tpu_custom_call.1} parent=5 // pred_region
        %s278 = ssub.s32 %s18, 1
        // Predicated region
        $region53: #{tpu_custom_call.1} parent=51 // pred_check
          %p279 = pneg %p191
        $region54: #{tpu_custom_call.1} parent=51 // pred_check_branch
          %281 = sbr.rel (%p279) target = $region56
        $region55: #{tpu_custom_call.1} parent=51 // pred_region
          %282 = dma.done [#allocation3], 256
        $region56: #{tpu_custom_call.1} parent=51 // pred_fallthru
          _
        %p283 = scmp.lt.s32.totalorder %s23, 1
        %s284 = scalar_select %p283, %s23, 1
        %s285 = smul.addr %s284, 8
        %s286 = scalar_lea.vmem %s0, %s285
        %p287 = pneg %p44
        %p288 = pneg %p41
        %p289 = pneg %p65
        %p290 = pneg %p62
        %p291 = pneg %p86
        %p292 = pneg %p83
        %p293 = pneg %p107
        %p294 = pneg %p104
        %p295 = pneg %p128
        %p296 = pneg %p125
        %p297 = pneg %p149
        %p298 = pneg %p146
        %p299 = pneg %p170
        %p300 = pneg %p167
        %p301 = pneg %p191
        %p302 = pneg %p188
        %p303 = pneg %p217
        %p304 = pneg %p214
        %s305 = sand.u32 %s204, 1
        %s306 = scalar_lea.sflag [#allocation4], %s305
        %s307 = sand.u32 %s204, 1
        %s308 = smul.addr %s307, 8
        %s309 = scalar_lea.vmem [#allocation5], %s308
        %p310 = scmp.lt.s32.totalorder %s23, 1
        %s311 = scalar_select %p310, %s23, 1
        %s312 = smul.addr %s311, 8
        %s313 = scalar_lea.vmem %s0, %s312
        %v315 = vld [vmem:[%s313] sm:$0xff]
        %v316 = vpack.c.bf16 %v315, %v315
        %v317 = vld [vmem:[%s1] sm:$0xf]
        %v318 = vld [vmem:[%s1 + $0x4] sm:$0xf]
        %v319 = vld [vmem:[%s1 + $0x8] sm:$0xf]
        %v320 = vld [vmem:[%s1 + $0xc] sm:$0xf]
        %v325 = vunpack.c.l.b16 %v317
        %v326 = vunpack.c.l.b16 %v318
        %v327 = vunpack.c.l.b16 %v319
        %v328 = vunpack.c.l.b16 %v320
        %v329 = vpack.c.b16 %v326, %v325
        %v330 = vpack.c.b16 %v328, %v327
        %vm333 = vcmask 261120
        %v335 = vsel %vm333, %v316, 0
        %337 = vmatprep.subr.bf16.mxu0 0
        %338 = vmatpush1.bf16.msra.mxu0 0
        %339 = vmatprep.subr.bf16.mxu0 0
        %340 = vmatpush1.bf16.msra.mxu0 0
        %341 = vmatprep.subr.bf16.mxu0 0
        %342 = vmatpush1.bf16.msra.mxu0 0
        %343 = vmatprep.subr.bf16.mxu0 0
        %344 = vmatpush1.bf16.msra.mxu0 0
        %345 = vmatprep.subr.bf16.mxu0 0
        %346 = vmatpush1.bf16.msra.mxu0 0
        %347 = vmatprep.subr.bf16.mxu0 0
        %348 = vmatpush1.bf16.msra.mxu0 0
        %349 = vmatprep.subr.bf16.mxu0 0
        %350 = vmatpush1.bf16.msra.mxu0 %v330
        %351 = vmatprep.subr.bf16.mxu0 0
        %352 = vmatpush1.bf16.msra.mxu0 %v329
        %353 = vmatprep.subr.bf16.mxu0 0
        %354 = vmatpush2.bf16.msra.mxu0 0
        %355 = vmatprep.subr.bf16.mxu0 0
        %356 = vmatpush2.bf16.msra.mxu0 0
        %357 = vmatprep.subr.bf16.mxu0 0
        %358 = vmatpush2.bf16.msra.mxu0 0
        %359 = vmatprep.subr.bf16.mxu0 0
        %360 = vmatpush2.bf16.msra.mxu0 0
        %361 = vmatprep.subr.bf16.mxu0 0
        %362 = vmatpush2.bf16.msra.mxu0 0
        %363 = vmatprep.subr.bf16.mxu0 0
        %364 = vmatpush2.bf16.msra.mxu0 0
        %365 = vmatprep.subr.bf16.mxu0 0
        %366 = vmatpush2.bf16.msra.mxu0 0
        %367 = vmatprep.subr.bf16.mxu0 0
        %368 = vmatpush2.bf16.msra.mxu0 0
        %369 = vmatprep.mubr.bf16.mxu0 0
        %370 = vmatmul.mubr.bf16.gmra.mxu0 %v335
        %v371 = vpop.f32.mrf.mxu0
        %v372 = vadd.f32 0.0, %v371
        %v373 = vpop.f32.mrf.mxu0
        %v374 = vpop.f32.mrf.mxu0
        %v375 = vpop.f32.mrf.mxu0
        %376 = vdwg.mxu0
        %v377 = vmul.f32 %v372, %v372
        %v378 = vsel %vm333, %v377, 0.0
        %379 = vadd.xlane.f32.xlu0 %v378
        %v380 = vpop.xlane.xlu0 %379
        %v381 = vrcp.pop 32.0
        %v382 = vmul.f32 %v380, %v381
        %v383 = vadd.f32 %v382, 1e-06
        %v384 = vrsqrt.pop %v383
        %v385 = vmul.f32 %v372, %v384
        %v386 = vpack.c.bf16 %v385, %v385
        %v387 = vld [vmem:[%s2] sm:$0xff]
        %v388 = vld [vmem:[%s2 + $0x8] sm:$0xf]
        %v389 = vld [vmem:[%s2 + $0xc] sm:$0xff]
        %v390 = vld [vmem:[%s2 + $0x14] sm:$0xf]
        %v391 = vld [vmem:[%s2 + $0x18] sm:$0xff]
        %v392 = vld [vmem:[%s2 + $0x20] sm:$0xf]
        %v393 = vld [vmem:[%s2 + $0x24] sm:$0xff]
        %v394 = vld [vmem:[%s2 + $0x2c] sm:$0xf]
        %v403 = vunpack.c.l.b16 %v387
        %v404 = vunpack.c.h.b16 %v387
        %v405 = vunpack.c.l.b16 %v388
        %v406 = vunpack.c.l.b16 %v389
        %v407 = vunpack.c.h.b16 %v389
        %v408 = vunpack.c.l.b16 %v390
        %v409 = vunpack.c.l.b16 %v391
        %v410 = vunpack.c.h.b16 %v391
        %v411 = vunpack.c.l.b16 %v392
        %v412 = vunpack.c.l.b16 %v393
        %v413 = vunpack.c.h.b16 %v393
        %v414 = vunpack.c.l.b16 %v394
        %v415 = vpack.c.b16 %v406, %v403
        %v416 = vpack.c.b16 %v407, %v404
        %v417 = vpack.c.b16 %v408, %v405
        %v418 = vpack.c.b16 %v412, %v409
        %v419 = vpack.c.b16 %v413, %v410
        %v420 = vpack.c.b16 %v414, %v411
        %v428 = vsel %vm333, %v386, 0
        %430 = vmatprep.subr.bf16.mxu0 0
        %431 = vmatpush1.bf16.msra.mxu0 0
        %432 = vmatprep.subr.bf16.mxu0 0
        %433 = vmatpush1.bf16.msra.mxu0 0
        %434 = vmatprep.subr.bf16.mxu0 0
        %435 = vmatpush1.bf16.msra.mxu0 0
        %436 = vmatprep.subr.bf16.mxu0 0
        %437 = vmatpush1.bf16.msra.mxu0 0
        %438 = vmatprep.subr.bf16.mxu0 0
        %439 = vmatpush1.bf16.msra.mxu0 0
        %440 = vmatprep.subr.bf16.mxu0 0
        %441 = vmatpush1.bf16.msra.mxu0 0
        %442 = vmatprep.subr.bf16.mxu0 %v419
        %443 = vmatpush1.bf16.msra.mxu0 %v418
        %444 = vmatprep.subr.bf16.mxu0 %v416
        %445 = vmatpush1.bf16.msra.mxu0 %v415
        %446 = vmatprep.subr.bf16.mxu0 0
        %447 = vmatpush2.bf16.msra.mxu0 0
        %448 = vmatprep.subr.bf16.mxu0 0
        %449 = vmatpush2.bf16.msra.mxu0 0
        %450 = vmatprep.subr.bf16.mxu0 0
        %451 = vmatpush2.bf16.msra.mxu0 0
        %452 = vmatprep.subr.bf16.mxu0 0
        %453 = vmatpush2.bf16.msra.mxu0 0
        %454 = vmatprep.subr.bf16.mxu0 0
        %455 = vmatpush2.bf16.msra.mxu0 0
        %456 = vmatprep.subr.bf16.mxu0 0
        %457 = vmatpush2.bf16.msra.mxu0 0
        %458 = vmatprep.subr.bf16.mxu0 0
        %459 = vmatpush2.bf16.msra.mxu0 0
        %460 = vmatprep.subr.bf16.mxu0 0
        %461 = vmatpush2.bf16.msra.mxu0 0
        %462 = vmatprep.mubr.bf16.mxu0 0
        %463 = vmatmul.mubr.bf16.gmra.mxu0 %v428
        %v464 = vpop.f32.mrf.mxu0
        %v465 = vadd.f32 0.0, %v464
        %v466 = vpop.f32.mrf.mxu0
        %v467 = vadd.f32 0.0, %v466
        %v468 = vpop.f32.mrf.mxu0
        %v469 = vpop.f32.mrf.mxu0
        %470 = vdwg.mxu0
        %471 = vmatprep.subr.bf16.mxu0 0
        %472 = vmatpush1.bf16.msra.mxu0 0
        %473 = vmatprep.subr.bf16.mxu0 0
        %474 = vmatpush1.bf16.msra.mxu0 0
        %475 = vmatprep.subr.bf16.mxu0 0
        %476 = vmatpush1.bf16.msra.mxu0 0
        %477 = vmatprep.subr.bf16.mxu0 0
        %478 = vmatpush1.bf16.msra.mxu0 0
        %479 = vmatprep.subr.bf16.mxu0 0
        %480 = vmatpush1.bf16.msra.mxu0 0
        %481 = vmatprep.subr.bf16.mxu0 0
        %482 = vmatpush1.bf16.msra.mxu0 0
        %483 = vmatprep.subr.bf16.mxu0 0
        %484 = vmatpush1.bf16.msra.mxu0 %v420
        %485 = vmatprep.subr.bf16.mxu0 0
        %486 = vmatpush1.bf16.msra.mxu0 %v417
        %487 = vmatprep.subr.bf16.mxu0 0
        %488 = vmatpush2.bf16.msra.mxu0 0
        %489 = vmatprep.subr.bf16.mxu0 0
        %490 = vmatpush2.bf16.msra.mxu0 0
        %491 = vmatprep.subr.bf16.mxu0 0
        %492 = vmatpush2.bf16.msra.mxu0 0
        %493 = vmatprep.subr.bf16.mxu0 0
        %494 = vmatpush2.bf16.msra.mxu0 0
        %495 = vmatprep.subr.bf16.mxu0 0
        %496 = vmatpush2.bf16.msra.mxu0 0
        %497 = vmatprep.subr.bf16.mxu0 0
        %498 = vmatpush2.bf16.msra.mxu0 0
        %499 = vmatprep.subr.bf16.mxu0 0
        %500 = vmatpush2.bf16.msra.mxu0 0
        %501 = vmatprep.subr.bf16.mxu0 0
        %502 = vmatpush2.bf16.msra.mxu0 0
        %503 = vmatprep.mubr.bf16.mxu0 0
        %504 = vmatmul.mubr.bf16.gmra.mxu0 %v428
        %v505 = vpop.f32.mrf.mxu0
        %v506 = vadd.f32 0.0, %v505
        %v507 = vpop.f32.mrf.mxu0
        %v508 = vpop.f32.mrf.mxu0
        %v509 = vpop.f32.mrf.mxu0
        %510 = vdwg.mxu0
        %v511 = vld [vmem:[%s3] sm:$0xff]
        %v512 = vld [vmem:[%s3 + $0x8] sm:$0xff]
        %v513 = vmul.f32 %v465, %v511
        %v514 = vmul.f32 %v467, %v512
        %v515 = vadd.f32 %v513, %v514
        %517 = vrot.lane.b32.xlu0 %v515, 112
        %v518 = vpop.permute.xlu0 %517
        %520 = vrot.lane.b32.xlu0 %v515, 96
        %v521 = vpop.permute.xlu0 %520
        %523 = vrot.lane.b32.xlu0 %v515, 80
        %v524 = vpop.permute.xlu0 %523
        %v526 = vcombine.low %v515, %v521
        %v527 = vcombine.high %v515, %v521
        %v529 = vunpack.c.l.s4 1983009808
        %v530 = vunpack.c.0.s8 %v529
        %v531 = vlaneseq
        %v532 = vshrl.u32 %v531, 7
        %v533 = vsub.s32 %v530, %v532
        %v534 = vrot.slane %v526, %v533
        %v536 = vunpack.c.l.s4 1983009808
        %v537 = vunpack.c.0.s8 %v536
        %v538 = vlaneseq
        %v539 = vshrl.u32 %v538, 7
        %v540 = vsub.s32 %v537, %v539
        %v541 = vrot.slane %v527, %v540
        %v542 = vcombine.low %v518, %v524
        %v543 = vcombine.high %v518, %v524
        %v545 = vunpack.c.l.s4 1983009808
        %v546 = vunpack.c.0.s8 %v545
        %v547 = vlaneseq
        %v548 = vshrl.u32 %v547, 7
        %v549 = vsub.s32 %v546, %v548
        %v550 = vrot.slane %v542, %v549
        %v552 = vunpack.c.l.s4 1983009808
        %v553 = vunpack.c.0.s8 %v552
        %v554 = vlaneseq
        %v555 = vshrl.u32 %v554, 7
        %v556 = vsub.s32 %v553, %v555
        %v557 = vrot.slane %v543, %v556
        %v558 = vcombine.low %v534, %v550
        %v559 = vcombine.high %v534, %v550
        %v561 = vunpack.c.l.s4 1934713408
        %v562 = vunpack.c.0.s8 %v561
        %v563 = vlaneseq
        %v564 = vshrl.u32 %v563, 7
        %v565 = vsub.s32 %v562, %v564
        %v566 = vrot.slane %v558, %v565
        %v568 = vunpack.c.l.s4 1934713408
        %v569 = vunpack.c.0.s8 %v568
        %v570 = vlaneseq
        %v571 = vshrl.u32 %v570, 7
        %v572 = vsub.s32 %v569, %v571
        %v573 = vrot.slane %v559, %v572
        %v574 = vcombine.low %v541, %v557
        %v575 = vcombine.high %v541, %v557
        %v577 = vunpack.c.l.s4 1934713408
        %v578 = vunpack.c.0.s8 %v577
        %v579 = vlaneseq
        %v580 = vshrl.u32 %v579, 7
        %v581 = vsub.s32 %v578, %v580
        %v582 = vrot.slane %v574, %v581
        %v584 = vunpack.c.l.s4 1934713408
        %v585 = vunpack.c.0.s8 %v584
        %v586 = vlaneseq
        %v587 = vshrl.u32 %v586, 7
        %v588 = vsub.s32 %v585, %v587
        %v589 = vrot.slane %v575, %v588
        %v590 = vcombine.high %v566, 0.0
        %v591 = vcombine.high %v573, 0.0
        %v592 = vcombine.high %v582, 0.0
        %v593 = vcombine.high %v589, 0.0
        %v594 = vcombine.low %v566, %v573
        %v596 = vunpack.c.l.s4 1983009808
        %v597 = vunpack.c.0.s8 %v596
        %v598 = vlaneseq
        %v599 = vshrl.u32 %v598, 7
        %v600 = vsub.s32 %v597, %v599
        %v601 = vrot.slane %v594, %v600
        %v602 = vcombine.low %v590, %v591
        %v604 = vunpack.c.l.s4 1983009808
        %v605 = vunpack.c.0.s8 %v604
        %v606 = vlaneseq
        %v607 = vshrl.u32 %v606, 7
        %v608 = vsub.s32 %v605, %v607
        %v609 = vrot.slane %v602, %v608
        %v610 = vcombine.low %v582, %v589
        %v612 = vunpack.c.l.s4 1983009808
        %v613 = vunpack.c.0.s8 %v612
        %v614 = vlaneseq
        %v615 = vshrl.u32 %v614, 7
        %v616 = vsub.s32 %v613, %v615
        %v617 = vrot.slane %v610, %v616
        %v618 = vcombine.low %v592, %v593
        %v620 = vunpack.c.l.s4 1983009808
        %v621 = vunpack.c.0.s8 %v620
        %v622 = vlaneseq
        %v623 = vshrl.u32 %v622, 7
        %v624 = vsub.s32 %v621, %v623
        %v625 = vrot.slane %v618, %v624
        %v626 = vcombine.low %v601, %v609
        %v627 = vcombine.high %v601, %v609
        %v629 = vunpack.c.l.s4 1934713408
        %v630 = vunpack.c.0.s8 %v629
        %v631 = vlaneseq
        %v632 = vshrl.u32 %v631, 7
        %v633 = vsub.s32 %v630, %v632
        %v634 = vrot.slane %v626, %v633
        %v636 = vunpack.c.l.s4 1934713408
        %v637 = vunpack.c.0.s8 %v636
        %v638 = vlaneseq
        %v639 = vshrl.u32 %v638, 7
        %v640 = vsub.s32 %v637, %v639
        %v641 = vrot.slane %v627, %v640
        %v642 = vcombine.low %v617, %v625
        %v643 = vcombine.high %v617, %v625
        %v645 = vunpack.c.l.s4 1934713408
        %v646 = vunpack.c.0.s8 %v645
        %v647 = vlaneseq
        %v648 = vshrl.u32 %v647, 7
        %v649 = vsub.s32 %v646, %v648
        %v650 = vrot.slane %v642, %v649
        %v652 = vunpack.c.l.s4 1934713408
        %v653 = vunpack.c.0.s8 %v652
        %v654 = vlaneseq
        %v655 = vshrl.u32 %v654, 7
        %v656 = vsub.s32 %v653, %v655
        %v657 = vrot.slane %v643, %v656
        %v658 = vcombine.low %v634, %v650
        %v659 = vcombine.high %v634, %v650
        %v660 = vcombine.low %v641, %v657
        %v661 = vcombine.high %v641, %v657
        %v662 = vpack.c.bf16 %v658, %v658
        %v663 = vpack.c.bf16 %v659, %v659
        %v664 = vpack.c.bf16 %v660, %v660
        %v665 = vpack.c.bf16 %v661, %v661
        %666 = vrot.lane.b32.xlu0 %v515, 64
        %v667 = vpop.permute.xlu0 %666
        %668 = vrot.lane.b32.xlu0 %v518, 64
        %v669 = vpop.permute.xlu0 %668
        %670 = vrot.lane.b32.xlu0 %v521, 64
        %v671 = vpop.permute.xlu0 %670
        %672 = vrot.lane.b32.xlu0 %v524, 64
        %v673 = vpop.permute.xlu0 %672
        %v678 = vcombine.low %v667, %v671
        %v679 = vcombine.high %v667, %v671
        %v681 = vunpack.c.l.s4 1983009808
        %v682 = vunpack.c.0.s8 %v681
        %v683 = vlaneseq
        %v684 = vshrl.u32 %v683, 7
        %v685 = vsub.s32 %v682, %v684
        %v686 = vrot.slane %v678, %v685
        %v688 = vunpack.c.l.s4 1983009808
        %v689 = vunpack.c.0.s8 %v688
        %v690 = vlaneseq
        %v691 = vshrl.u32 %v690, 7
        %v692 = vsub.s32 %v689, %v691
        %v693 = vrot.slane %v679, %v692
        %v694 = vcombine.low %v669, %v673
        %v695 = vcombine.high %v669, %v673
        %v697 = vunpack.c.l.s4 1983009808
        %v698 = vunpack.c.0.s8 %v697
        %v699 = vlaneseq
        %v700 = vshrl.u32 %v699, 7
        %v701 = vsub.s32 %v698, %v700
        %v702 = vrot.slane %v694, %v701
        %v704 = vunpack.c.l.s4 1983009808
        %v705 = vunpack.c.0.s8 %v704
        %v706 = vlaneseq
        %v707 = vshrl.u32 %v706, 7
        %v708 = vsub.s32 %v705, %v707
        %v709 = vrot.slane %v695, %v708
        %v710 = vcombine.low %v686, %v702
        %v711 = vcombine.high %v686, %v702
        %v713 = vunpack.c.l.s4 1934713408
        %v714 = vunpack.c.0.s8 %v713
        %v715 = vlaneseq
        %v716 = vshrl.u32 %v715, 7
        %v717 = vsub.s32 %v714, %v716
        %v718 = vrot.slane %v710, %v717
        %v720 = vunpack.c.l.s4 1934713408
        %v721 = vunpack.c.0.s8 %v720
        %v722 = vlaneseq
        %v723 = vshrl.u32 %v722, 7
        %v724 = vsub.s32 %v721, %v723
        %v725 = vrot.slane %v711, %v724
        %v726 = vcombine.low %v693, %v709
        %v727 = vcombine.high %v693, %v709
        %v729 = vunpack.c.l.s4 1934713408
        %v730 = vunpack.c.0.s8 %v729
        %v731 = vlaneseq
        %v732 = vshrl.u32 %v731, 7
        %v733 = vsub.s32 %v730, %v732
        %v734 = vrot.slane %v726, %v733
        %v736 = vunpack.c.l.s4 1934713408
        %v737 = vunpack.c.0.s8 %v736
        %v738 = vlaneseq
        %v739 = vshrl.u32 %v738, 7
        %v740 = vsub.s32 %v737, %v739
        %v741 = vrot.slane %v727, %v740
        %v742 = vcombine.high %v718, 0.0
        %v743 = vcombine.high %v725, 0.0
        %v744 = vcombine.high %v734, 0.0
        %v745 = vcombine.high %v741, 0.0
        %v746 = vcombine.low %v718, %v725
        %v748 = vunpack.c.l.s4 1983009808
        %v749 = vunpack.c.0.s8 %v748
        %v750 = vlaneseq
        %v751 = vshrl.u32 %v750, 7
        %v752 = vsub.s32 %v749, %v751
        %v753 = vrot.slane %v746, %v752
        %v754 = vcombine.low %v742, %v743
        %v756 = vunpack.c.l.s4 1983009808
        %v757 = vunpack.c.0.s8 %v756
        %v758 = vlaneseq
        %v759 = vshrl.u32 %v758, 7
        %v760 = vsub.s32 %v757, %v759
        %v761 = vrot.slane %v754, %v760
        %v762 = vcombine.low %v734, %v741
        %v764 = vunpack.c.l.s4 1983009808
        %v765 = vunpack.c.0.s8 %v764
        %v766 = vlaneseq
        %v767 = vshrl.u32 %v766, 7
        %v768 = vsub.s32 %v765, %v767
        %v769 = vrot.slane %v762, %v768
        %v770 = vcombine.low %v744, %v745
        %v772 = vunpack.c.l.s4 1983009808
        %v773 = vunpack.c.0.s8 %v772
        %v774 = vlaneseq
        %v775 = vshrl.u32 %v774, 7
        %v776 = vsub.s32 %v773, %v775
        %v777 = vrot.slane %v770, %v776
        %v778 = vcombine.low %v753, %v761
        %v779 = vcombine.high %v753, %v761
        %v781 = vunpack.c.l.s4 1934713408
        %v782 = vunpack.c.0.s8 %v781
        %v783 = vlaneseq
        %v784 = vshrl.u32 %v783, 7
        %v785 = vsub.s32 %v782, %v784
        %v786 = vrot.slane %v778, %v785
        %v788 = vunpack.c.l.s4 1934713408
        %v789 = vunpack.c.0.s8 %v788
        %v790 = vlaneseq
        %v791 = vshrl.u32 %v790, 7
        %v792 = vsub.s32 %v789, %v791
        %v793 = vrot.slane %v779, %v792
        %v794 = vcombine.low %v769, %v777
        %v795 = vcombine.high %v769, %v777
        %v797 = vunpack.c.l.s4 1934713408
        %v798 = vunpack.c.0.s8 %v797
        %v799 = vlaneseq
        %v800 = vshrl.u32 %v799, 7
        %v801 = vsub.s32 %v798, %v800
        %v802 = vrot.slane %v794, %v801
        %v804 = vunpack.c.l.s4 1934713408
        %v805 = vunpack.c.0.s8 %v804
        %v806 = vlaneseq
        %v807 = vshrl.u32 %v806, 7
        %v808 = vsub.s32 %v805, %v807
        %v809 = vrot.slane %v795, %v808
        %v810 = vcombine.low %v786, %v802
        %v811 = vcombine.high %v786, %v802
        %v812 = vcombine.low %v793, %v809
        %v813 = vcombine.high %v793, %v809
        %v814 = vpack.c.bf16 %v810, %v810
        %v815 = vpack.c.bf16 %v811, %v811
        %v816 = vpack.c.bf16 %v812, %v812
        %v817 = vpack.c.bf16 %v813, %v813
        %819 = vrot.lane.b32.xlu0 %v506, 112
        %v820 = vpop.permute.xlu0 %819
        %822 = vrot.lane.b32.xlu0 %v506, 96
        %v823 = vpop.permute.xlu0 %822
        %825 = vrot.lane.b32.xlu0 %v506, 80
        %v826 = vpop.permute.xlu0 %825
        %v828 = vcombine.low %v506, %v823
        %v829 = vcombine.high %v506, %v823
        %v831 = vunpack.c.l.s4 1983009808
        %v832 = vunpack.c.0.s8 %v831
        %v833 = vlaneseq
        %v834 = vshrl.u32 %v833, 7
        %v835 = vsub.s32 %v832, %v834
        %v836 = vrot.slane %v828, %v835
        %v838 = vunpack.c.l.s4 1983009808
        %v839 = vunpack.c.0.s8 %v838
        %v840 = vlaneseq
        %v841 = vshrl.u32 %v840, 7
        %v842 = vsub.s32 %v839, %v841
        %v843 = vrot.slane %v829, %v842
        %v844 = vcombine.low %v820, %v826
        %v845 = vcombine.high %v820, %v826
        %v847 = vunpack.c.l.s4 1983009808
        %v848 = vunpack.c.0.s8 %v847
        %v849 = vlaneseq
        %v850 = vshrl.u32 %v849, 7
        %v851 = vsub.s32 %v848, %v850
        %v852 = vrot.slane %v844, %v851
        %v854 = vunpack.c.l.s4 1983009808
        %v855 = vunpack.c.0.s8 %v854
        %v856 = vlaneseq
        %v857 = vshrl.u32 %v856, 7
        %v858 = vsub.s32 %v855, %v857
        %v859 = vrot.slane %v845, %v858
        %v860 = vcombine.low %v836, %v852
        %v861 = vcombine.high %v836, %v852
        %v863 = vunpack.c.l.s4 1934713408
        %v864 = vunpack.c.0.s8 %v863
        %v865 = vlaneseq
        %v866 = vshrl.u32 %v865, 7
        %v867 = vsub.s32 %v864, %v866
        %v868 = vrot.slane %v860, %v867
        %v870 = vunpack.c.l.s4 1934713408
        %v871 = vunpack.c.0.s8 %v870
        %v872 = vlaneseq
        %v873 = vshrl.u32 %v872, 7
        %v874 = vsub.s32 %v871, %v873
        %v875 = vrot.slane %v861, %v874
        %v876 = vcombine.low %v843, %v859
        %v877 = vcombine.high %v843, %v859
        %v879 = vunpack.c.l.s4 1934713408
        %v880 = vunpack.c.0.s8 %v879
        %v881 = vlaneseq
        %v882 = vshrl.u32 %v881, 7
        %v883 = vsub.s32 %v880, %v882
        %v884 = vrot.slane %v876, %v883
        %v886 = vunpack.c.l.s4 1934713408
        %v887 = vunpack.c.0.s8 %v886
        %v888 = vlaneseq
        %v889 = vshrl.u32 %v888, 7
        %v890 = vsub.s32 %v887, %v889
        %v891 = vrot.slane %v877, %v890
        %v892 = vcombine.high %v868, 0.0
        %v893 = vcombine.high %v875, 0.0
        %v894 = vcombine.high %v884, 0.0
        %v895 = vcombine.high %v891, 0.0
        %v896 = vcombine.low %v868, %v875
        %v898 = vunpack.c.l.s4 1983009808
        %v899 = vunpack.c.0.s8 %v898
        %v900 = vlaneseq
        %v901 = vshrl.u32 %v900, 7
        %v902 = vsub.s32 %v899, %v901
        %v903 = vrot.slane %v896, %v902
        %v904 = vcombine.low %v892, %v893
        %v906 = vunpack.c.l.s4 1983009808
        %v907 = vunpack.c.0.s8 %v906
        %v908 = vlaneseq
        %v909 = vshrl.u32 %v908, 7
        %v910 = vsub.s32 %v907, %v909
        %v911 = vrot.slane %v904, %v910
        %v912 = vcombine.low %v884, %v891
        %v914 = vunpack.c.l.s4 1983009808
        %v915 = vunpack.c.0.s8 %v914
        %v916 = vlaneseq
        %v917 = vshrl.u32 %v916, 7
        %v918 = vsub.s32 %v915, %v917
        %v919 = vrot.slane %v912, %v918
        %v920 = vcombine.low %v894, %v895
        %v922 = vunpack.c.l.s4 1983009808
        %v923 = vunpack.c.0.s8 %v922
        %v924 = vlaneseq
        %v925 = vshrl.u32 %v924, 7
        %v926 = vsub.s32 %v923, %v925
        %v927 = vrot.slane %v920, %v926
        %v928 = vcombine.low %v903, %v911
        %v929 = vcombine.high %v903, %v911
        %v931 = vunpack.c.l.s4 1934713408
        %v932 = vunpack.c.0.s8 %v931
        %v933 = vlaneseq
        %v934 = vshrl.u32 %v933, 7
        %v935 = vsub.s32 %v932, %v934
        %v936 = vrot.slane %v928, %v935
        %v938 = vunpack.c.l.s4 1934713408
        %v939 = vunpack.c.0.s8 %v938
        %v940 = vlaneseq
        %v941 = vshrl.u32 %v940, 7
        %v942 = vsub.s32 %v939, %v941
        %v943 = vrot.slane %v929, %v942
        %v944 = vcombine.low %v919, %v927
        %v945 = vcombine.high %v919, %v927
        %v947 = vunpack.c.l.s4 1934713408
        %v948 = vunpack.c.0.s8 %v947
        %v949 = vlaneseq
        %v950 = vshrl.u32 %v949, 7
        %v951 = vsub.s32 %v948, %v950
        %v952 = vrot.slane %v944, %v951
        %v954 = vunpack.c.l.s4 1934713408
        %v955 = vunpack.c.0.s8 %v954
        %v956 = vlaneseq
        %v957 = vshrl.u32 %v956, 7
        %v958 = vsub.s32 %v955, %v957
        %v959 = vrot.slane %v945, %v958
        %v960 = vcombine.low %v936, %v952
        %v961 = vcombine.high %v936, %v952
        %v962 = vcombine.low %v943, %v959
        %v963 = vcombine.high %v943, %v959
        %v964 = vpack.c.bf16 %v960, %v960
        %v965 = vpack.c.bf16 %v961, %v961
        %v966 = vpack.c.bf16 %v962, %v962
        %v967 = vpack.c.bf16 %v963, %v963
        %vm968 = vcmask 130048
        %v970 = vsel %vm968, %v662, 0
        %v973 = vsel %vm968, %v814, 0
        %975 = vmatprep.subr.bf16.mxu0 0
        %976 = vmatpush1.bf16.xpose.msra.mxu0 0
        %977 = vmatprep.subr.bf16.mxu0 0
        %978 = vmatpush1.bf16.xpose.msra.mxu0 0
        %979 = vmatprep.subr.bf16.mxu0 0
        %980 = vmatpush1.bf16.xpose.msra.mxu0 0
        %981 = vmatprep.subr.bf16.mxu0 0
        %982 = vmatpush1.bf16.xpose.msra.mxu0 0
        %983 = vmatprep.subr.bf16.mxu0 0
        %984 = vmatpush1.bf16.xpose.msra.mxu0 0
        %985 = vmatprep.subr.bf16.mxu0 0
        %986 = vmatpush1.bf16.xpose.msra.mxu0 0
        %987 = vmatprep.subr.bf16.mxu0 0
        %988 = vmatpush1.bf16.xpose.msra.mxu0 0
        %989 = vmatprep.subr.bf16.mxu0 0
        %990 = vmatpush1.bf16.xpose.msra.mxu0 %v973
        %991 = vmatprep.subr.bf16.mxu0 0
        %992 = vmatpush2.bf16.xpose.msra.mxu0 0
        %993 = vmatprep.subr.bf16.mxu0 0
        %994 = vmatpush2.bf16.xpose.msra.mxu0 0
        %995 = vmatprep.subr.bf16.mxu0 0
        %996 = vmatpush2.bf16.xpose.msra.mxu0 0
        %997 = vmatprep.subr.bf16.mxu0 0
        %998 = vmatpush2.bf16.xpose.msra.mxu0 0
        %999 = vmatprep.subr.bf16.mxu0 0
        %1000 = vmatpush2.bf16.xpose.msra.mxu0 0
        %1001 = vmatprep.subr.bf16.mxu0 0
        %1002 = vmatpush2.bf16.xpose.msra.mxu0 0
        %1003 = vmatprep.subr.bf16.mxu0 0
        %1004 = vmatpush2.bf16.xpose.msra.mxu0 0
        %1005 = vmatprep.subr.bf16.mxu0 0
        %1006 = vmatpush2.bf16.xpose.msra.mxu0 0
        %1007 = vmatprep.mubr.bf16.mxu0 0
        %1008 = vmatmul.mubr.bf16.gmra.mxu0 %v970
        %v1009 = vpop.f32.mrf.mxu0
        %v1010 = vadd.f32 0.0, %v1009
        %v1011 = vpop.f32.mrf.mxu0
        %v1012 = vpop.f32.mrf.mxu0
        %v1013 = vpop.f32.mrf.mxu0
        %1014 = vdwg.mxu0
        %v1016 = vsel %vm968, %v663, 0
        %v1019 = vsel %vm968, %v815, 0
        %1021 = vmatprep.subr.bf16.mxu0 0
        %1022 = vmatpush1.bf16.xpose.msra.mxu0 0
        %1023 = vmatprep.subr.bf16.mxu0 0
        %1024 = vmatpush1.bf16.xpose.msra.mxu0 0
        %1025 = vmatprep.subr.bf16.mxu0 0
        %1026 = vmatpush1.bf16.xpose.msra.mxu0 0
        %1027 = vmatprep.subr.bf16.mxu0 0
        %1028 = vmatpush1.bf16.xpose.msra.mxu0 0
        %1029 = vmatprep.subr.bf16.mxu0 0
        %1030 = vmatpush1.bf16.xpose.msra.mxu0 0
        %1031 = vmatprep.subr.bf16.mxu0 0
        %1032 = vmatpush1.bf16.xpose.msra.mxu0 0
        %1033 = vmatprep.subr.bf16.mxu0 0
        %1034 = vmatpush1.bf16.xpose.msra.mxu0 0
        %1035 = vmatprep.subr.bf16.mxu0 0
        %1036 = vmatpush1.bf16.xpose.msra.mxu0 %v1019
        %1037 = vmatprep.subr.bf16.mxu0 0
        %1038 = vmatpush2.bf16.xpose.msra.mxu0 0
        %1039 = vmatprep.subr.bf16.mxu0 0
        %1040 = vmatpush2.bf16.xpose.msra.mxu0 0
        %1041 = vmatprep.subr.bf16.mxu0 0
        %1042 = vmatpush2.bf16.xpose.msra.mxu0 0
        %1043 = vmatprep.subr.bf16.mxu0 0
        %1044 = vmatpush2.bf16.xpose.msra.mxu0 0
        %1045 = vmatprep.subr.bf16.mxu0 0
        %1046 = vmatpush2.bf16.xpose.msra.mxu0 0
        %1047 = vmatprep.subr.bf16.mxu0 0
        %1048 = vmatpush2.bf16.xpose.msra.mxu0 0
        %1049 = vmatprep.subr.bf16.mxu0 0
        %1050 = vmatpush2.bf16.xpose.msra.mxu0 0
        %1051 = vmatprep.subr.bf16.mxu0 0
        %1052 = vmatpush2.bf16.xpose.msra.mxu0 0
        %1053 = vmatprep.mubr.bf16.mxu0 0
        %1054 = vmatmul.mubr.bf16.gmra.mxu0 %v1016
        %v1055 = vpop.f32.mrf.mxu0
        %v1056 = vadd.f32 0.0, %v1055
        %v1057 = vpop.f32.mrf.mxu0
        %v1058 = vpop.f32.mrf.mxu0
        %v1059 = vpop.f32.mrf.mxu0
        %1060 = vdwg.mxu0
        %v1062 = vsel %vm968, %v664, 0
        %v1065 = vsel %vm968, %v816, 0
        %1067 = vmatprep.subr.bf16.mxu0 0
        %1068 = vmatpush1.bf16.xpose.msra.mxu0 0
        %1069 = vmatprep.subr.bf16.mxu0 0
        %1070 = vmatpush1.bf16.xpose.msra.mxu0 0
        %1071 = vmatprep.subr.bf16.mxu0 0
        %1072 = vmatpush1.bf16.xpose.msra.mxu0 0
        %1073 = vmatprep.subr.bf16.mxu0 0
        %1074 = vmatpush1.bf16.xpose.msra.mxu0 0
        %1075 = vmatprep.subr.bf16.mxu0 0
        %1076 = vmatpush1.bf16.xpose.msra.mxu0 0
        %1077 = vmatprep.subr.bf16.mxu0 0
        %1078 = vmatpush1.bf16.xpose.msra.mxu0 0
        %1079 = vmatprep.subr.bf16.mxu0 0
        %1080 = vmatpush1.bf16.xpose.msra.mxu0 0
        %1081 = vmatprep.subr.bf16.mxu0 0
        %1082 = vmatpush1.bf16.xpose.msra.mxu0 %v1065
        %1083 = vmatprep.subr.bf16.mxu0 0
        %1084 = vmatpush2.bf16.xpose.msra.mxu0 0
        %1085 = vmatprep.subr.bf16.mxu0 0
        %1086 = vmatpush2.bf16.xpose.msra.mxu0 0
        %1087 = vmatprep.subr.bf16.mxu0 0
        %1088 = vmatpush2.bf16.xpose.msra.mxu0 0
        %1089 = vmatprep.subr.bf16.mxu0 0
        %1090 = vmatpush2.bf16.xpose.msra.mxu0 0
        %1091 = vmatprep.subr.bf16.mxu0 0
        %1092 = vmatpush2.bf16.xpose.msra.mxu0 0
        %1093 = vmatprep.subr.bf16.mxu0 0
        %1094 = vmatpush2.bf16.xpose.msra.mxu0 0
        %1095 = vmatprep.subr.bf16.mxu0 0
        %1096 = vmatpush2.bf16.xpose.msra.mxu0 0
        %1097 = vmatprep.subr.bf16.mxu0 0
        %1098 = vmatpush2.bf16.xpose.msra.mxu0 0
        %1099 = vmatprep.mubr.bf16.mxu0 0
        %1100 = vmatmul.mubr.bf16.gmra.mxu0 %v1062
        %v1101 = vpop.f32.mrf.mxu0
        %v1102 = vadd.f32 0.0, %v1101
        %v1103 = vpop.f32.mrf.mxu0
        %v1104 = vpop.f32.mrf.mxu0
        %v1105 = vpop.f32.mrf.mxu0
        %1106 = vdwg.mxu0
        %v1108 = vsel %vm968, %v665, 0
        %v1111 = vsel %vm968, %v817, 0
        %1113 = vmatprep.subr.bf16.mxu0 0
        %1114 = vmatpush1.bf16.xpose.msra.mxu0 0
        %1115 = vmatprep.subr.bf16.mxu0 0
        %1116 = vmatpush1.bf16.xpose.msra.mxu0 0
        %1117 = vmatprep.subr.bf16.mxu0 0
        %1118 = vmatpush1.bf16.xpose.msra.mxu0 0
        %1119 = vmatprep.subr.bf16.mxu0 0
        %1120 = vmatpush1.bf16.xpose.msra.mxu0 0
        %1121 = vmatprep.subr.bf16.mxu0 0
        %1122 = vmatpush1.bf16.xpose.msra.mxu0 0
        %1123 = vmatprep.subr.bf16.mxu0 0
        %1124 = vmatpush1.bf16.xpose.msra.mxu0 0
        %1125 = vmatprep.subr.bf16.mxu0 0
        %1126 = vmatpush1.bf16.xpose.msra.mxu0 0
        %1127 = vmatprep.subr.bf16.mxu0 0
        %1128 = vmatpush1.bf16.xpose.msra.mxu0 %v1111
        %1129 = vmatprep.subr.bf16.mxu0 0
        %1130 = vmatpush2.bf16.xpose.msra.mxu0 0
        %1131 = vmatprep.subr.bf16.mxu0 0
        %1132 = vmatpush2.bf16.xpose.msra.mxu0 0
        %1133 = vmatprep.subr.bf16.mxu0 0
        %1134 = vmatpush2.bf16.xpose.msra.mxu0 0
        %1135 = vmatprep.subr.bf16.mxu0 0
        %1136 = vmatpush2.bf16.xpose.msra.mxu0 0
        %1137 = vmatprep.subr.bf16.mxu0 0
        %1138 = vmatpush2.bf16.xpose.msra.mxu0 0
        %1139 = vmatprep.subr.bf16.mxu0 0
        %1140 = vmatpush2.bf16.xpose.msra.mxu0 0
        %1141 = vmatprep.subr.bf16.mxu0 0
        %1142 = vmatpush2.bf16.xpose.msra.mxu0 0
        %1143 = vmatprep.subr.bf16.mxu0 0
        %1144 = vmatpush2.bf16.xpose.msra.mxu0 0
        %1145 = vmatprep.mubr.bf16.mxu0 0
        %1146 = vmatmul.mubr.bf16.gmra.mxu0 %v1108
        %v1147 = vpop.f32.mrf.mxu0
        %v1148 = vadd.f32 0.0, %v1147
        %v1149 = vpop.f32.mrf.mxu0
        %v1150 = vpop.f32.mrf.mxu0
        %v1151 = vpop.f32.mrf.mxu0
        %1152 = vdwg.mxu0
        %vm1153 = vcmask 64512
        %v1154 = vsel %vm1153, %v1010, -inf
        %1155 = vmax.xlane.f32.xlu0 %v1154
        %v1156 = vpop.xlane.xlu0 %1155
        %v1157 = vsel %vm1153, %v1056, -inf
        %1158 = vmax.xlane.f32.xlu0 %v1157
        %v1159 = vpop.xlane.xlu0 %1158
        %v1160 = vsel %vm1153, %v1102, -inf
        %1161 = vmax.xlane.f32.xlu0 %v1160
        %v1162 = vpop.xlane.xlu0 %1161
        %v1163 = vsel %vm1153, %v1148, -inf
        %1164 = vmax.xlane.f32.xlu0 %v1163
        %v1165 = vpop.xlane.xlu0 %1164
        %v1166 = vsub.f32 %v1010, %v1156
        %v1167 = vsub.f32 %v1056, %v1159
        %v1168 = vsub.f32 %v1102, %v1162
        %v1169 = vsub.f32 %v1148, %v1165
        %v1170 = vmul.f32 %v1166, 1.442695
        %v1171 = vpow.pop %v1170
        %v1172 = vmul.f32 %v1167, 1.442695
        %v1173 = vpow.pop %v1172
        %v1174 = vmul.f32 %v1168, 1.442695
        %v1175 = vpow.pop %v1174
        %v1176 = vmul.f32 %v1169, 1.442695
        %v1177 = vpow.pop %v1176
        %v1178 = vsel %vm1153, %v1171, 0.0
        %1179 = vadd.xlane.f32.xlu0 %v1178
        %v1180 = vpop.xlane.xlu0 %1179
        %v1181 = vsel %vm1153, %v1173, 0.0
        %1182 = vadd.xlane.f32.xlu0 %v1181
        %v1183 = vpop.xlane.xlu0 %1182
        %v1184 = vsel %vm1153, %v1175, 0.0
        %1185 = vadd.xlane.f32.xlu0 %v1184
        %v1186 = vpop.xlane.xlu0 %1185
        %v1187 = vsel %vm1153, %v1177, 0.0
        %1188 = vadd.xlane.f32.xlu0 %v1187
        %v1189 = vpop.xlane.xlu0 %1188
        %v1190 = vrcp.pop %v1180
        %v1191 = vrcp.pop %v1183
        %v1192 = vrcp.pop %v1186
        %v1193 = vrcp.pop %v1189
        %v1194 = vmul.f32 %v1171, %v1190
        %v1195 = vmul.f32 %v1173, %v1191
        %v1196 = vmul.f32 %v1175, %v1192
        %v1197 = vmul.f32 %v1177, %v1193
        %v1198 = vpack.c.bf16 %v1194, %v1194
        %v1199 = vpack.c.bf16 %v1195, %v1195
        %v1200 = vpack.c.bf16 %v1196, %v1196
        %v1201 = vpack.c.bf16 %v1197, %v1197
        %v1203 = vsel %vm1153, %v1198, 0
        %vm1205 = vcmask 1043456
        %v1207 = vsel %vm1205, %v964, 0
        %1209 = vmatprep.subr.bf16.mxu0 0
        %1210 = vmatpush1.bf16.msra.mxu0 0
        %1211 = vmatprep.subr.bf16.mxu0 0
        %1212 = vmatpush1.bf16.msra.mxu0 0
        %1213 = vmatprep.subr.bf16.mxu0 0
        %1214 = vmatpush1.bf16.msra.mxu0 0
        %1215 = vmatprep.subr.bf16.mxu0 0
        %1216 = vmatpush1.bf16.msra.mxu0 0
        %1217 = vmatprep.subr.bf16.mxu0 0
        %1218 = vmatpush1.bf16.msra.mxu0 0
        %1219 = vmatprep.subr.bf16.mxu0 0
        %1220 = vmatpush1.bf16.msra.mxu0 0
        %1221 = vmatprep.subr.bf16.mxu0 0
        %1222 = vmatpush1.bf16.msra.mxu0 0
        %1223 = vmatprep.subr.bf16.mxu0 0
        %1224 = vmatpush1.bf16.msra.mxu0 %v1207
        %1225 = vmatprep.subr.bf16.mxu0 0
        %1226 = vmatpush2.bf16.msra.mxu0 0
        %1227 = vmatprep.subr.bf16.mxu0 0
        %1228 = vmatpush2.bf16.msra.mxu0 0
        %1229 = vmatprep.subr.bf16.mxu0 0
        %1230 = vmatpush2.bf16.msra.mxu0 0
        %1231 = vmatprep.subr.bf16.mxu0 0
        %1232 = vmatpush2.bf16.msra.mxu0 0
        %1233 = vmatprep.subr.bf16.mxu0 0
        %1234 = vmatpush2.bf16.msra.mxu0 0
        %1235 = vmatprep.subr.bf16.mxu0 0
        %1236 = vmatpush2.bf16.msra.mxu0 0
        %1237 = vmatprep.subr.bf16.mxu0 0
        %1238 = vmatpush2.bf16.msra.mxu0 0
        %1239 = vmatprep.subr.bf16.mxu0 0
        %1240 = vmatpush2.bf16.msra.mxu0 0
        %1241 = vmatprep.mubr.bf16.mxu0 0
        %1242 = vmatmul.mubr.bf16.gmra.mxu0 %v1203
        %v1243 = vpop.f32.mrf.mxu0
        %v1244 = vadd.f32 0.0, %v1243
        %v1245 = vpop.f32.mrf.mxu0
        %v1246 = vpop.f32.mrf.mxu0
        %v1247 = vpop.f32.mrf.mxu0
        %1248 = vdwg.mxu0
        %v1250 = vsel %vm1153, %v1199, 0
        %v1253 = vsel %vm1205, %v965, 0
        %1255 = vmatprep.subr.bf16.mxu0 0
        %1256 = vmatpush1.bf16.msra.mxu0 0
        %1257 = vmatprep.subr.bf16.mxu0 0
        %1258 = vmatpush1.bf16.msra.mxu0 0
        %1259 = vmatprep.subr.bf16.mxu0 0
        %1260 = vmatpush1.bf16.msra.mxu0 0
        %1261 = vmatprep.subr.bf16.mxu0 0
        %1262 = vmatpush1.bf16.msra.mxu0 0
        %1263 = vmatprep.subr.bf16.mxu0 0
        %1264 = vmatpush1.bf16.msra.mxu0 0
        %1265 = vmatprep.subr.bf16.mxu0 0
        %1266 = vmatpush1.bf16.msra.mxu0 0
        %1267 = vmatprep.subr.bf16.mxu0 0
        %1268 = vmatpush1.bf16.msra.mxu0 0
        %1269 = vmatprep.subr.bf16.mxu0 0
        %1270 = vmatpush1.bf16.msra.mxu0 %v1253
        %1271 = vmatprep.subr.bf16.mxu0 0
        %1272 = vmatpush2.bf16.msra.mxu0 0
        %1273 = vmatprep.subr.bf16.mxu0 0
        %1274 = vmatpush2.bf16.msra.mxu0 0
        %1275 = vmatprep.subr.bf16.mxu0 0
        %1276 = vmatpush2.bf16.msra.mxu0 0
        %1277 = vmatprep.subr.bf16.mxu0 0
        %1278 = vmatpush2.bf16.msra.mxu0 0
        %1279 = vmatprep.subr.bf16.mxu0 0
        %1280 = vmatpush2.bf16.msra.mxu0 0
        %1281 = vmatprep.subr.bf16.mxu0 0
        %1282 = vmatpush2.bf16.msra.mxu0 0
        %1283 = vmatprep.subr.bf16.mxu0 0
        %1284 = vmatpush2.bf16.msra.mxu0 0
        %1285 = vmatprep.subr.bf16.mxu0 0
        %1286 = vmatpush2.bf16.msra.mxu0 0
        %1287 = vmatprep.mubr.bf16.mxu0 0
        %1288 = vmatmul.mubr.bf16.gmra.mxu0 %v1250
        %v1289 = vpop.f32.mrf.mxu0
        %v1290 = vadd.f32 0.0, %v1289
        %v1291 = vpop.f32.mrf.mxu0
        %v1292 = vpop.f32.mrf.mxu0
        %v1293 = vpop.f32.mrf.mxu0
        %1294 = vdwg.mxu0
        %v1296 = vsel %vm1153, %v1200, 0
        %v1299 = vsel %vm1205, %v966, 0
        %1301 = vmatprep.subr.bf16.mxu0 0
        %1302 = vmatpush1.bf16.msra.mxu0 0
        %1303 = vmatprep.subr.bf16.mxu0 0
        %1304 = vmatpush1.bf16.msra.mxu0 0
        %1305 = vmatprep.subr.bf16.mxu0 0
        %1306 = vmatpush1.bf16.msra.mxu0 0
        %1307 = vmatprep.subr.bf16.mxu0 0
        %1308 = vmatpush1.bf16.msra.mxu0 0
        %1309 = vmatprep.subr.bf16.mxu0 0
        %1310 = vmatpush1.bf16.msra.mxu0 0
        %1311 = vmatprep.subr.bf16.mxu0 0
        %1312 = vmatpush1.bf16.msra.mxu0 0
        %1313 = vmatprep.subr.bf16.mxu0 0
        %1314 = vmatpush1.bf16.msra.mxu0 0
        %1315 = vmatprep.subr.bf16.mxu0 0
        %1316 = vmatpush1.bf16.msra.mxu0 %v1299
        %1317 = vmatprep.subr.bf16.mxu0 0
        %1318 = vmatpush2.bf16.msra.mxu0 0
        %1319 = vmatprep.subr.bf16.mxu0 0
        %1320 = vmatpush2.bf16.msra.mxu0 0
        %1321 = vmatprep.subr.bf16.mxu0 0
        %1322 = vmatpush2.bf16.msra.mxu0 0
        %1323 = vmatprep.subr.bf16.mxu0 0
        %1324 = vmatpush2.bf16.msra.mxu0 0
        %1325 = vmatprep.subr.bf16.mxu0 0
        %1326 = vmatpush2.bf16.msra.mxu0 0
        %1327 = vmatprep.subr.bf16.mxu0 0
        %1328 = vmatpush2.bf16.msra.mxu0 0
        %1329 = vmatprep.subr.bf16.mxu0 0
        %1330 = vmatpush2.bf16.msra.mxu0 0
        %1331 = vmatprep.subr.bf16.mxu0 0
        %1332 = vmatpush2.bf16.msra.mxu0 0
        %1333 = vmatprep.mubr.bf16.mxu0 0
        %1334 = vmatmul.mubr.bf16.gmra.mxu0 %v1296
        %v1335 = vpop.f32.mrf.mxu0
        %v1336 = vadd.f32 0.0, %v1335
        %v1337 = vpop.f32.mrf.mxu0
        %v1338 = vpop.f32.mrf.mxu0
        %v1339 = vpop.f32.mrf.mxu0
        %1340 = vdwg.mxu0
        %v1342 = vsel %vm1153, %v1201, 0
        %v1345 = vsel %vm1205, %v967, 0
        %1347 = vmatprep.subr.bf16.mxu0 0
        %1348 = vmatpush1.bf16.msra.mxu0 0
        %1349 = vmatprep.subr.bf16.mxu0 0
        %1350 = vmatpush1.bf16.msra.mxu0 0
        %1351 = vmatprep.subr.bf16.mxu0 0
        %1352 = vmatpush1.bf16.msra.mxu0 0
        %1353 = vmatprep.subr.bf16.mxu0 0
        %1354 = vmatpush1.bf16.msra.mxu0 0
        %1355 = vmatprep.subr.bf16.mxu0 0
        %1356 = vmatpush1.bf16.msra.mxu0 0
        %1357 = vmatprep.subr.bf16.mxu0 0
        %1358 = vmatpush1.bf16.msra.mxu0 0
        %1359 = vmatprep.subr.bf16.mxu0 0
        %1360 = vmatpush1.bf16.msra.mxu0 0
        %1361 = vmatprep.subr.bf16.mxu0 0
        %1362 = vmatpush1.bf16.msra.mxu0 %v1345
        %1363 = vmatprep.subr.bf16.mxu0 0
        %1364 = vmatpush2.bf16.msra.mxu0 0
        %1365 = vmatprep.subr.bf16.mxu0 0
        %1366 = vmatpush2.bf16.msra.mxu0 0
        %1367 = vmatprep.subr.bf16.mxu0 0
        %1368 = vmatpush2.bf16.msra.mxu0 0
        %1369 = vmatprep.subr.bf16.mxu0 0
        %1370 = vmatpush2.bf16.msra.mxu0 0
        %1371 = vmatprep.subr.bf16.mxu0 0
        %1372 = vmatpush2.bf16.msra.mxu0 0
        %1373 = vmatprep.subr.bf16.mxu0 0
        %1374 = vmatpush2.bf16.msra.mxu0 0
        %1375 = vmatprep.subr.bf16.mxu0 0
        %1376 = vmatpush2.bf16.msra.mxu0 0
        %1377 = vmatprep.subr.bf16.mxu0 0
        %1378 = vmatpush2.bf16.msra.mxu0 0
        %1379 = vmatprep.mubr.bf16.mxu0 0
        %1380 = vmatmul.mubr.bf16.gmra.mxu0 %v1342
        %v1381 = vpop.f32.mrf.mxu0
        %v1382 = vadd.f32 0.0, %v1381
        %v1383 = vpop.f32.mrf.mxu0
        %v1384 = vpop.f32.mrf.mxu0
        %v1385 = vpop.f32.mrf.mxu0
        %1386 = vdwg.mxu0
        %v1387 = vcombine.low %v1244, %v1336
        %v1388 = vcombine.high %v1244, %v1336
        %v1390 = vunpack.c.l.s4 1983009808
        %v1391 = vunpack.c.0.s8 %v1390
        %v1392 = vlaneseq
        %v1393 = vshrl.u32 %v1392, 7
        %v1394 = vsub.s32 %v1391, %v1393
        %v1395 = vrot.slane %v1387, %v1394
        %v1397 = vunpack.c.l.s4 1983009808
        %v1398 = vunpack.c.0.s8 %v1397
        %v1399 = vlaneseq
        %v1400 = vshrl.u32 %v1399, 7
        %v1401 = vsub.s32 %v1398, %v1400
        %v1402 = vrot.slane %v1388, %v1401
        %v1403 = vcombine.low %v1290, %v1382
        %v1404 = vcombine.high %v1290, %v1382
        %v1406 = vunpack.c.l.s4 1983009808
        %v1407 = vunpack.c.0.s8 %v1406
        %v1408 = vlaneseq
        %v1409 = vshrl.u32 %v1408, 7
        %v1410 = vsub.s32 %v1407, %v1409
        %v1411 = vrot.slane %v1403, %v1410
        %v1413 = vunpack.c.l.s4 1983009808
        %v1414 = vunpack.c.0.s8 %v1413
        %v1415 = vlaneseq
        %v1416 = vshrl.u32 %v1415, 7
        %v1417 = vsub.s32 %v1414, %v1416
        %v1418 = vrot.slane %v1404, %v1417
        %v1419 = vcombine.low %v1395, %v1411
        %v1420 = vcombine.high %v1395, %v1411
        %v1422 = vunpack.c.l.s4 1934713408
        %v1423 = vunpack.c.0.s8 %v1422
        %v1424 = vlaneseq
        %v1425 = vshrl.u32 %v1424, 7
        %v1426 = vsub.s32 %v1423, %v1425
        %v1427 = vrot.slane %v1419, %v1426
        %v1429 = vunpack.c.l.s4 1934713408
        %v1430 = vunpack.c.0.s8 %v1429
        %v1431 = vlaneseq
        %v1432 = vshrl.u32 %v1431, 7
        %v1433 = vsub.s32 %v1430, %v1432
        %v1434 = vrot.slane %v1420, %v1433
        %v1435 = vcombine.low %v1402, %v1418
        %v1436 = vcombine.high %v1402, %v1418
        %v1438 = vunpack.c.l.s4 1934713408
        %v1439 = vunpack.c.0.s8 %v1438
        %v1440 = vlaneseq
        %v1441 = vshrl.u32 %v1440, 7
        %v1442 = vsub.s32 %v1439, %v1441
        %v1443 = vrot.slane %v1435, %v1442
        %v1445 = vunpack.c.l.s4 1934713408
        %v1446 = vunpack.c.0.s8 %v1445
        %v1447 = vlaneseq
        %v1448 = vshrl.u32 %v1447, 7
        %v1449 = vsub.s32 %v1446, %v1448
        %v1450 = vrot.slane %v1436, %v1449
        %v1451 = vcombine.high %v1427, 0.0
        %v1452 = vcombine.high %v1434, 0.0
        %v1453 = vcombine.high %v1443, 0.0
        %v1454 = vcombine.high %v1450, 0.0
        %v1455 = vcombine.low %v1427, %v1434
        %v1457 = vunpack.c.l.s4 1983009808
        %v1458 = vunpack.c.0.s8 %v1457
        %v1459 = vlaneseq
        %v1460 = vshrl.u32 %v1459, 7
        %v1461 = vsub.s32 %v1458, %v1460
        %v1462 = vrot.slane %v1455, %v1461
        %v1463 = vcombine.low %v1451, %v1452
        %v1465 = vunpack.c.l.s4 1983009808
        %v1466 = vunpack.c.0.s8 %v1465
        %v1467 = vlaneseq
        %v1468 = vshrl.u32 %v1467, 7
        %v1469 = vsub.s32 %v1466, %v1468
        %v1470 = vrot.slane %v1463, %v1469
        %v1471 = vcombine.low %v1443, %v1450
        %v1473 = vunpack.c.l.s4 1983009808
        %v1474 = vunpack.c.0.s8 %v1473
        %v1475 = vlaneseq
        %v1476 = vshrl.u32 %v1475, 7
        %v1477 = vsub.s32 %v1474, %v1476
        %v1478 = vrot.slane %v1471, %v1477
        %v1479 = vcombine.low %v1453, %v1454
        %v1481 = vunpack.c.l.s4 1983009808
        %v1482 = vunpack.c.0.s8 %v1481
        %v1483 = vlaneseq
        %v1484 = vshrl.u32 %v1483, 7
        %v1485 = vsub.s32 %v1482, %v1484
        %v1486 = vrot.slane %v1479, %v1485
        %v1487 = vcombine.low %v1462, %v1470
        %v1488 = vcombine.high %v1462, %v1470
        %v1490 = vunpack.c.l.s4 1934713408
        %v1491 = vunpack.c.0.s8 %v1490
        %v1492 = vlaneseq
        %v1493 = vshrl.u32 %v1492, 7
        %v1494 = vsub.s32 %v1491, %v1493
        %v1495 = vrot.slane %v1487, %v1494
        %v1497 = vunpack.c.l.s4 1934713408
        %v1498 = vunpack.c.0.s8 %v1497
        %v1499 = vlaneseq
        %v1500 = vshrl.u32 %v1499, 7
        %v1501 = vsub.s32 %v1498, %v1500
        %v1502 = vrot.slane %v1488, %v1501
        %v1503 = vcombine.low %v1478, %v1486
        %v1504 = vcombine.high %v1478, %v1486
        %v1506 = vunpack.c.l.s4 1934713408
        %v1507 = vunpack.c.0.s8 %v1506
        %v1508 = vlaneseq
        %v1509 = vshrl.u32 %v1508, 7
        %v1510 = vsub.s32 %v1507, %v1509
        %v1511 = vrot.slane %v1503, %v1510
        %v1513 = vunpack.c.l.s4 1934713408
        %v1514 = vunpack.c.0.s8 %v1513
        %v1515 = vlaneseq
        %v1516 = vshrl.u32 %v1515, 7
        %v1517 = vsub.s32 %v1514, %v1516
        %v1518 = vrot.slane %v1504, %v1517
        %v1519 = vcombine.low %v1495, %v1511
        %v1520 = vcombine.high %v1495, %v1511
        %v1521 = vcombine.low %v1502, %v1518
        %v1522 = vcombine.high %v1502, %v1518
        %1524 = vrot.lane.b32.xlu0 %v1520, 16
        %v1525 = vpop.permute.xlu0 %1524
        %1528 = vrot.lane.b32.xlu0 %v1521, 32
        %v1529 = vpop.permute.xlu0 %1528
        %1532 = vrot.lane.b32.xlu0 %v1522, 48
        %v1533 = vpop.permute.xlu0 %1532
        %v1535 = vsel %vm968, %v1519, %v1525
        %v1536 = vsel %vm333, %v1535, %v1529
        %vm1537 = vcmask 392192
        %v1538 = vsel %vm1537, %v1536, %v1533
        %v1539 = vpack.c.bf16 %v1538, %v1538
        %v1540 = vld [vmem:[%s4] sm:$0xf]
        %v1541 = vld [vmem:[%s4 + $0x4] sm:$0xf]
        %v1542 = vld [vmem:[%s4 + $0x8] sm:$0xf]
        %v1543 = vld [vmem:[%s4 + $0xc] sm:$0xf]
        %v1544 = vld [vmem:[%s4 + $0x10] sm:$0xf]
        %v1545 = vld [vmem:[%s4 + $0x14] sm:$0xf]
        %v1546 = vld [vmem:[%s4 + $0x18] sm:$0xf]
        %v1547 = vld [vmem:[%s4 + $0x1c] sm:$0xf]
        %v1556 = vunpack.c.l.b16 %v1540
        %v1557 = vunpack.c.l.b16 %v1541
        %v1558 = vunpack.c.l.b16 %v1542
        %v1559 = vunpack.c.l.b16 %v1543
        %v1560 = vunpack.c.l.b16 %v1544
        %v1561 = vunpack.c.l.b16 %v1545
        %v1562 = vunpack.c.l.b16 %v1546
        %v1563 = vunpack.c.l.b16 %v1547
        %v1564 = vpack.c.b16 %v1557, %v1556
        %v1565 = vpack.c.b16 %v1559, %v1558
        %v1566 = vpack.c.b16 %v1561, %v1560
        %v1567 = vpack.c.b16 %v1563, %v1562
        %vm1572 = vcmask 523264
        %v1574 = vsel %vm1572, %v1539, 0
        %1576 = vmatprep.subr.bf16.mxu0 0
        %1577 = vmatpush1.bf16.msra.mxu0 0
        %1578 = vmatprep.subr.bf16.mxu0 0
        %1579 = vmatpush1.bf16.msra.mxu0 0
        %1580 = vmatprep.subr.bf16.mxu0 0
        %1581 = vmatpush1.bf16.msra.mxu0 0
        %1582 = vmatprep.subr.bf16.mxu0 0
        %1583 = vmatpush1.bf16.msra.mxu0 0
        %1584 = vmatprep.subr.bf16.mxu0 0
        %1585 = vmatpush1.bf16.msra.mxu0 %v1567
        %1586 = vmatprep.subr.bf16.mxu0 0
        %1587 = vmatpush1.bf16.msra.mxu0 %v1566
        %1588 = vmatprep.subr.bf16.mxu0 0
        %1589 = vmatpush1.bf16.msra.mxu0 %v1565
        %1590 = vmatprep.subr.bf16.mxu0 0
        %1591 = vmatpush1.bf16.msra.mxu0 %v1564
        %1592 = vmatprep.subr.bf16.mxu0 0
        %1593 = vmatpush2.bf16.msra.mxu0 0
        %1594 = vmatprep.subr.bf16.mxu0 0
        %1595 = vmatpush2.bf16.msra.mxu0 0
        %1596 = vmatprep.subr.bf16.mxu0 0
        %1597 = vmatpush2.bf16.msra.mxu0 0
        %1598 = vmatprep.subr.bf16.mxu0 0
        %1599 = vmatpush2.bf16.msra.mxu0 0
        %1600 = vmatprep.subr.bf16.mxu0 0
        %1601 = vmatpush2.bf16.msra.mxu0 0
        %1602 = vmatprep.subr.bf16.mxu0 0
        %1603 = vmatpush2.bf16.msra.mxu0 0
        %1604 = vmatprep.subr.bf16.mxu0 0
        %1605 = vmatpush2.bf16.msra.mxu0 0
        %1606 = vmatprep.subr.bf16.mxu0 0
        %1607 = vmatpush2.bf16.msra.mxu0 0
        %1608 = vmatprep.mubr.bf16.mxu0 0
        %1609 = vmatmul.mubr.bf16.gmra.mxu0 %v1574
        %v1610 = vpop.f32.mrf.mxu0
        %v1611 = vadd.f32 %v315, %v1610
        %v1612 = vpop.f32.mrf.mxu0
        %v1613 = vpop.f32.mrf.mxu0
        %v1614 = vpop.f32.mrf.mxu0
        %1615 = vdwg.mxu0
        %v1616 = vld [vmem:[#allocation2] ss:$0 sm:$0xff]
        %v1617 = vld [vmem:[#allocation2 + $0x1] ss:$0 sm:$0xff]
        %v1618 = vsel %vm333, %v1611, 0.0
        %1619 = vadd.xlane.f32.xlu0 %v1618
        %v1620 = vpop.xlane.xlu0 %1619
        %v1621 = vmul.f32 %v1620, %v381
        %v1622 = vsub.f32 %v1611, %v1621
        %v1623 = vmul.f32 %v1622, %v1622
        %v1624 = vsel %vm333, %v1623, 0.0
        %1625 = vadd.xlane.f32.xlu0 %v1624
        %v1626 = vpop.xlane.xlu0 %1625
        %v1627 = vmul.f32 %v1626, %v381
        %v1628 = vadd.f32 %v1627, 1e-12
        %v1629 = vrsqrt.pop %v1628
        %v1630 = vmul.f32 %v1622, %v1629
        %v1631 = vmul.f32 %v1630, %v1616
        %v1632 = vadd.f32 %v1631, %v1617
        %v1633 = vpack.c.bf16 %v1632, %v1632
        %v1634 = vld [vmem:[%s5] sm:$0xff]
        %v1635 = vld [vmem:[%s5 + $0x8] sm:$0xff]
        %v1636 = vld [vmem:[%s5 + $0x10] sm:$0xff]
        %v1637 = vld [vmem:[%s5 + $0x18] sm:$0xff]
        %s1638 = scalar_lea.vmem [#allocation2], 5
        %v1639 = vld [vmem:[%s1638] ss:$8 sm:$0x3]
        %v1641 = vlaneseq
        %v1642 = vshrl.u32 %v1641, 7
        %v1643 = vsub.s32 0, %v1642
        %v1644 = vrot.slane %v1639, %v1643
        %v1645 = vlaneseq
        %v1646 = vshrl.u32 %v1645, 7
        %v1647 = vsub.s32 1, %v1646
        %v1648 = vrot.slane %v1639, %v1647
        %v1655 = vunpack.c.l.b16 %v1634
        %v1656 = vunpack.c.h.b16 %v1634
        %v1657 = vunpack.c.l.b16 %v1635
        %v1658 = vunpack.c.h.b16 %v1635
        %v1659 = vunpack.c.l.b16 %v1636
        %v1660 = vunpack.c.h.b16 %v1636
        %v1661 = vunpack.c.l.b16 %v1637
        %v1662 = vunpack.c.h.b16 %v1637
        %v1663 = vpack.c.b16 %v1657, %v1655
        %v1664 = vpack.c.b16 %v1658, %v1656
        %v1665 = vpack.c.b16 %v1661, %v1659
        %v1666 = vpack.c.b16 %v1662, %v1660
        %v1672 = vsel %vm333, %v1633, 0
        %1674 = vmatprep.subr.bf16.mxu0 0
        %1675 = vmatpush1.bf16.msra.mxu0 0
        %1676 = vmatprep.subr.bf16.mxu0 0
        %1677 = vmatpush1.bf16.msra.mxu0 0
        %1678 = vmatprep.subr.bf16.mxu0 0
        %1679 = vmatpush1.bf16.msra.mxu0 0
        %1680 = vmatprep.subr.bf16.mxu0 0
        %1681 = vmatpush1.bf16.msra.mxu0 0
        %1682 = vmatprep.subr.bf16.mxu0 0
        %1683 = vmatpush1.bf16.msra.mxu0 0
        %1684 = vmatprep.subr.bf16.mxu0 0
        %1685 = vmatpush1.bf16.msra.mxu0 0
        %1686 = vmatprep.subr.bf16.mxu0 %v1666
        %1687 = vmatpush1.bf16.msra.mxu0 %v1665
        %1688 = vmatprep.subr.bf16.mxu0 %v1664
        %1689 = vmatpush1.bf16.msra.mxu0 %v1663
        %1690 = vmatprep.subr.bf16.mxu0 0
        %1691 = vmatpush2.bf16.msra.mxu0 0
        %1692 = vmatprep.subr.bf16.mxu0 0
        %1693 = vmatpush2.bf16.msra.mxu0 0
        %1694 = vmatprep.subr.bf16.mxu0 0
        %1695 = vmatpush2.bf16.msra.mxu0 0
        %1696 = vmatprep.subr.bf16.mxu0 0
        %1697 = vmatpush2.bf16.msra.mxu0 0
        %1698 = vmatprep.subr.bf16.mxu0 0
        %1699 = vmatpush2.bf16.msra.mxu0 0
        %1700 = vmatprep.subr.bf16.mxu0 0
        %1701 = vmatpush2.bf16.msra.mxu0 0
        %1702 = vmatprep.subr.bf16.mxu0 0
        %1703 = vmatpush2.bf16.msra.mxu0 0
        %1704 = vmatprep.subr.bf16.mxu0 0
        %1705 = vmatpush2.bf16.msra.mxu0 0
        %1706 = vmatprep.mubr.bf16.mxu0 0
        %1707 = vmatmul.mubr.bf16.gmra.mxu0 %v1672
        %v1708 = vpop.f32.mrf.mxu0
        %v1709 = vadd.f32 %v1644, %v1708
        %v1710 = vpop.f32.mrf.mxu0
        %v1711 = vadd.f32 %v1648, %v1710
        %v1712 = vpop.f32.mrf.mxu0
        %v1713 = vpop.f32.mrf.mxu0
        %1714 = vdwg.mxu0
        %v1715 = vxor.u32 %v1709, 2147483648
        %v1716 = vmul.f32 %v1715, 1.442695
        %v1717 = vpow.pop %v1716
        %v1718 = vadd.f32 %v1717, 1.0
        %v1719 = vrcp.pop %v1718
        %v1720 = vmul.f32 1.0, %v1719
        %v1721 = vmul.f32 %v1709, %v1720
        %v1722 = vmul.f32 %v1721, %v1711
        %v1723 = vpack.c.bf16 %v1722, %v1722
        %v1724 = vld [vmem:[%s6] sm:$0xf]
        %v1725 = vld [vmem:[%s6 + $0x4] sm:$0xf]
        %v1726 = vld [vmem:[%s6 + $0x8] sm:$0xf]
        %v1727 = vld [vmem:[%s6 + $0xc] sm:$0xf]
        %v1728 = vld [vmem:[%s6 + $0x10] sm:$0xf]
        %v1729 = vld [vmem:[%s6 + $0x14] sm:$0xf]
        %v1730 = vld [vmem:[%s6 + $0x18] sm:$0xf]
        %v1731 = vld [vmem:[%s6 + $0x1c] sm:$0xf]
        %v1732 = vld [vmem:[%s6 + $0x20] sm:$0xf]
        %v1733 = vld [vmem:[%s6 + $0x24] sm:$0xf]
        %v1734 = vld [vmem:[%s6 + $0x28] sm:$0xf]
        %v1735 = vld [vmem:[%s6 + $0x2c] sm:$0xf]
        %v1736 = vld [vmem:[%s6 + $0x30] sm:$0xf]
        %v1737 = vld [vmem:[%s6 + $0x34] sm:$0xf]
        %v1738 = vld [vmem:[%s6 + $0x38] sm:$0xf]
        %v1739 = vld [vmem:[%s6 + $0x3c] sm:$0xf]
        %v1740 = vld [vmem:[#allocation2 + $0x4] ss:$0 sm:$0xff]
        %v1757 = vunpack.c.l.b16 %v1724
        %v1758 = vunpack.c.l.b16 %v1725
        %v1759 = vunpack.c.l.b16 %v1726
        %v1760 = vunpack.c.l.b16 %v1727
        %v1761 = vunpack.c.l.b16 %v1728
        %v1762 = vunpack.c.l.b16 %v1729
        %v1763 = vunpack.c.l.b16 %v1730
        %v1764 = vunpack.c.l.b16 %v1731
        %v1765 = vunpack.c.l.b16 %v1732
        %v1766 = vunpack.c.l.b16 %v1733
        %v1767 = vunpack.c.l.b16 %v1734
        %v1768 = vunpack.c.l.b16 %v1735
        %v1769 = vunpack.c.l.b16 %v1736
        %v1770 = vunpack.c.l.b16 %v1737
        %v1771 = vunpack.c.l.b16 %v1738
        %v1772 = vunpack.c.l.b16 %v1739
        %v1773 = vpack.c.b16 %v1758, %v1757
        %v1774 = vpack.c.b16 %v1760, %v1759
        %v1775 = vpack.c.b16 %v1762, %v1761
        %v1776 = vpack.c.b16 %v1764, %v1763
        %v1777 = vpack.c.b16 %v1766, %v1765
        %v1778 = vpack.c.b16 %v1768, %v1767
        %v1779 = vpack.c.b16 %v1770, %v1769
        %v1780 = vpack.c.b16 %v1772, %v1771
        %1789 = vmatprep.subr.bf16.mxu0 0
        %1790 = vmatpush1.bf16.msra.mxu0 %v1780
        %1791 = vmatprep.subr.bf16.mxu0 0
        %1792 = vmatpush1.bf16.msra.mxu0 %v1779
        %1793 = vmatprep.subr.bf16.mxu0 0
        %1794 = vmatpush1.bf16.msra.mxu0 %v1778
        %1795 = vmatprep.subr.bf16.mxu0 0
        %1796 = vmatpush1.bf16.msra.mxu0 %v1777
        %1797 = vmatprep.subr.bf16.mxu0 0
        %1798 = vmatpush1.bf16.msra.mxu0 %v1776
        %1799 = vmatprep.subr.bf16.mxu0 0
        %1800 = vmatpush1.bf16.msra.mxu0 %v1775
        %1801 = vmatprep.subr.bf16.mxu0 0
        %1802 = vmatpush1.bf16.msra.mxu0 %v1774
        %1803 = vmatprep.subr.bf16.mxu0 0
        %1804 = vmatpush1.bf16.msra.mxu0 %v1773
        %1805 = vmatprep.subr.bf16.mxu0 0
        %1806 = vmatpush2.bf16.msra.mxu0 0
        %1807 = vmatprep.subr.bf16.mxu0 0
        %1808 = vmatpush2.bf16.msra.mxu0 0
        %1809 = vmatprep.subr.bf16.mxu0 0
        %1810 = vmatpush2.bf16.msra.mxu0 0
        %1811 = vmatprep.subr.bf16.mxu0 0
        %1812 = vmatpush2.bf16.msra.mxu0 0
        %1813 = vmatprep.subr.bf16.mxu0 0
        %1814 = vmatpush2.bf16.msra.mxu0 0
        %1815 = vmatprep.subr.bf16.mxu0 0
        %1816 = vmatpush2.bf16.msra.mxu0 0
        %1817 = vmatprep.subr.bf16.mxu0 0
        %1818 = vmatpush2.bf16.msra.mxu0 0
        %1819 = vmatprep.subr.bf16.mxu0 0
        %1820 = vmatpush2.bf16.msra.mxu0 0
        %1821 = vmatprep.mubr.bf16.mxu0 0
        %1822 = vmatmul.mubr.bf16.gmra.mxu0 %v1723
        %v1823 = vpop.f32.mrf.mxu0
        %v1824 = vadd.f32 %v1740, %v1823
        %v1825 = vpop.f32.mrf.mxu0
        %v1826 = vpop.f32.mrf.mxu0
        %v1827 = vpop.f32.mrf.mxu0
        %1828 = vdwg.mxu0
        %v1829 = vadd.f32 %v1824, %v1632
        %v1830 = vld [vmem:[#allocation2 + $0x2] ss:$0 sm:$0xff]
        %v1831 = vld [vmem:[#allocation2 + $0x3] ss:$0 sm:$0xff]
        %v1832 = vsel %vm333, %v1829, 0.0
        %1833 = vadd.xlane.f32.xlu0 %v1832
        %v1834 = vpop.xlane.xlu0 %1833
        %v1835 = vmul.f32 %v1834, %v381
        %v1836 = vsub.f32 %v1829, %v1835
        %v1837 = vmul.f32 %v1836, %v1836
        %v1838 = vsel %vm333, %v1837, 0.0
        %1839 = vadd.xlane.f32.xlu0 %v1838
        %v1840 = vpop.xlane.xlu0 %1839
        %v1841 = vmul.f32 %v1840, %v381
        %v1842 = vadd.f32 %v1841, 1e-12
        %v1843 = vrsqrt.pop %v1842
        %v1844 = vmul.f32 %v1836, %v1843
        %v1845 = vmul.f32 %v1844, %v1830
        %v1846 = vadd.f32 %v1845, %v1831
        %1847 = vst.msk [vmem:[%s309] sm:$0xff] %vm333, %v1846
        %s1848 = sand.u32 %s204, 1
        %s1849 = scalar_lea.sflag [#allocation4], %s1848
        %s1850 = sand.u32 %s204, 1
        %s1851 = smul.addr %s1850, 8
        %s1852 = scalar_lea.vmem [#allocation5], %s1851
        // Predicated region
        $region57: #{tpu_custom_call.1} parent=51 // pred_check
          %p1853 = pneg %p214
        $region58: #{tpu_custom_call.1} parent=51 // pred_check_branch
          %1855 = sbr.rel (%p1853) target = $region60
        $region59: #{tpu_custom_call.1} parent=51 // pred_region
          %s1857 = ssub.s32 128, 128
          %1858 = vsyncadd %s1849, %s1857
          %s1859 = smul.addr %s23, 128
          %s1860 = scalar_lea.hbm %s8, %s1859
          %s1862 = sshll.u32 %s1852, 4
          %s1863 = int_to_ptr.vmem [resolvable:$true] %s1862
          %1865 = dma.vmem_to_hbm [thread:$0]  %s1863, 128, %s1860, %s1849
        $region60: #{tpu_custom_call.1} parent=51 // pred_fallthru
          _
      $region52: #{tpu_custom_call.1} parent=5 // pred_fallthru
        _
      %p1866 = scmp.le.s32.totalorder 2, %s18
      // Predicated region
      $region61: #{tpu_custom_call.1} parent=5 // pred_check
        %p1867 = pneg %p1866
      $region62: #{tpu_custom_call.1} parent=5 // pred_check_branch
        %1869 = sbr.rel (%p1867) target = $region64
      $region63: #{tpu_custom_call.1} parent=5 // pred_region
        %s1870 = ssub.s32 %s18, 2
        // Predicated region
        $region65: #{tpu_custom_call.1} parent=63 // pred_check
          %p1871 = pneg %p220
        $region66: #{tpu_custom_call.1} parent=63 // pred_check_branch
          %1873 = sbr.rel (%p1871) target = $region68
        $region67: #{tpu_custom_call.1} parent=63 // pred_region
          %s1874 = sand.u32 %s205, 1
          %s1875 = scalar_lea.sflag [#allocation4], %s1874
          %s1876 = sand.u32 %s205, 1
          %s1877 = smul.addr %s1876, 8
          %s1878 = scalar_lea.vmem [#allocation5], %s1877
          %1879 = dma.done %s1875, 128
        $region68: #{tpu_custom_call.1} parent=63 // pred_fallthru
          _
      $region64: #{tpu_custom_call.1} parent=5 // pred_fallthru
        _
    $region6: #{tpu_custom_call.1} parent=1 // loop_footer
      %s22 = sadd.s32 1, %s18
    $region7: #{tpu_custom_call.1} parent=1 // loop_footer_branch
      %17 = sbr.rel target = $region3
    $region8: #{tpu_custom_call.1} parent=1 // loop_exit
      _
    %1880 = vsyncpa [#allocation3], 1
    %s1881 = scalar_lea.sflag [#allocation3], 1
    %1882 = vsyncpa %s1881, 1
    %1883 = vsyncpa [#allocation4], 1
    %s1884 = scalar_lea.sflag [#allocation4], 1
    %1885 = vsyncpa %s1884, 1

</llo_original>
